<compile_context>
chip_gen: v6e
topology: v6e:2x2x1
jax: 0.10.0
libtpu: 0.0.40
codegen_flags: <defaults>
</compile_context>

<pallas_src>
import functools

import jax
import jax.numpy as jnp
from jax.experimental import pallas as pl
from jax.experimental.pallas import tpu as pltpu


def _build_conv_matrix(conv_weight, H, W, K):
    """(1, 2, K, K) OIHW weights -> (2, HW, HW) dense 'same'-conv matrices.

    M[0] maps the channel-mean map to the conv output, M[1] maps the
    channel-max map.  Zero padding at the borders is baked in (out-of-bounds
    taps simply have no entry).  Matches cross-correlation (nn.Conv2d).
    """
    p = K // 2
    HW = H * W
    w = conv_weight.reshape(2, K, K).astype(jnp.float32)
    idx = jnp.arange(HW, dtype=jnp.int32)
    ih, iw = idx // W, idx % W                       # input-pixel coords
    dh = ih[:, None] - ih[None, :]                   # (HW_in, HW_out)
    dw = iw[:, None] - iw[None, :]
    valid = (jnp.abs(dh) <= p) & (jnp.abs(dw) <= p)
    kh = jnp.clip(dh + p, 0, K - 1)
    kw = jnp.clip(dw + p, 0, K - 1)
    m_avg = jnp.where(valid, w[0][kh, kw], 0.0)      # (HW, HW)
    m_max = jnp.where(valid, w[1][kh, kw], 0.0)      # (HW, HW)
    return jnp.stack([m_avg, m_max], axis=0)         # (2, HW, HW)


def _spatial_attn_kernel(x_ref, m_ref, o_ref, sum_ref, max_ref, *,
                         C, Cb, HW, mask_c_tail):
    """Grid = (batch blocks, channel chunks).

    x_ref  : VMEM (Nb, Cb, HW) input chunk (H*W on the lane axis).
    m_ref  : VMEM (2, HW, HW)  resident conv matrices (avg, max).
    o_ref  : VMEM (Nb, HW)     sigmoid attention map (written on last chunk).
    sum_ref/max_ref : VMEM (Nb, HW) f32 running channel sum / max.
    """
    c = pl.program_id(1)
    nc = pl.num_programs(1)

    x = x_ref[...].astype(jnp.float32)               # (Nb, Cb, HW)
    if mask_c_tail:
        ch = c * Cb + jax.lax.broadcasted_iota(jnp.int32, x.shape, 1)
        in_range = ch < C
        x_sum = jnp.where(in_range, x, 0.0)
        x_max = jnp.where(in_range, x, -jnp.inf)
    else:
        x_sum = x
        x_max = x
    part_sum = jnp.sum(x_sum, axis=1)                # (Nb, HW)
    part_max = jnp.max(x_max, axis=1)                # (Nb, HW)

    @pl.when(c == 0)
    def _():
        sum_ref[...] = part_sum
        max_ref[...] = part_max

    @pl.when(c > 0)
    def _():
        sum_ref[...] = sum_ref[...] + part_sum
        max_ref[...] = jnp.maximum(max_ref[...], part_max)

    @pl.when(c == nc - 1)
    def _():
        avg = sum_ref[...] * (1.0 / C)               # channel mean
        # 2-in / 1-out KxK conv as two MXU matmuls against resident matrices.
        conv = jnp.dot(avg, m_ref[0],
                       precision=jax.lax.Precision.HIGHEST,
                       preferred_element_type=jnp.float32)
        conv = conv + jnp.dot(max_ref[...], m_ref[1],
                              precision=jax.lax.Precision.HIGHEST,
                              preferred_element_type=jnp.float32)
        o_ref[...] = jax.nn.sigmoid(conv).astype(o_ref.dtype)


def _select_blocks(N, C, HW, itemsize, budget_bytes):
    """Pick (Nb, Cb) so the per-step VMEM footprint fits `budget_bytes`."""
    mat_bytes = 2 * HW * HW * 4                      # resident conv matrices

    def estimate(nb, cb):
        in_block = nb * cb * HW * itemsize           # double-buffered
        out_block = nb * HW * itemsize               # double-buffered
        scratch = 2 * nb * HW * 4                    # sum + max accumulators
        temps = nb * cb * HW * 4 + 4 * nb * HW * 4   # f32 upcast + live partials
        return 2 * in_block + 2 * mat_bytes + 2 * out_block + scratch + temps

    # Batch block: equal to N when small; otherwise a multiple of 8 (sublane
    # tile) up to 64 to amortize per-step overhead and feed the MXU.
    nb_cands = [N] if N <= 8 else ([nb for nb in (64, 32, 16, 8) if nb <= N] or [8])
    # Channel chunk: whole C if it fits, else a multiple of 8.
    cb_cands = [C] if C <= 8 else [C] + list(range((C // 8) * 8, 0, -8))

    for nb in nb_cands:
        for cb in cb_cands:
            if estimate(nb, cb) <= budget_bytes:
                return nb, cb, estimate(nb, cb)
    nb = N if N <= 8 else 8
    cb = C if C <= 8 else 8
    return nb, cb, estimate(nb, cb)


def spatial_attention(x, conv_weight, kernel_size=7):
    """x: (N, C, H, W); conv_weight: (1, 2, K, K) OIHW. Returns (N, 1, H, W)."""
    assert kernel_size in (3, 7)
    N, C, H, W = x.shape
    K = kernel_size
    HW = H * W

    # TODO(synk): for HW large enough that the (2, HW, HW) conv matrix no longer
    # fits VMEM (roughly HW > 1024), fall back to the roll/mask conv path.
    assert 2 * HW * HW * 4 <= 8 * 1024 * 1024, (
        "conv matrix too large for resident VMEM; use the roll-based fallback")

    itemsize = x.dtype.itemsize
    Nb, Cb, vmem_est = _select_blocks(N, C, HW, itemsize, budget_bytes=20 << 20)
    mask_c_tail = (C % Cb) != 0

    x_flat = x.reshape(N, C, HW)                         # lane-dense layout
    conv_mat = _build_conv_matrix(conv_weight, H, W, K)  # (2, HW, HW) f32

    kernel = functools.partial(_spatial_attn_kernel, C=C, Cb=Cb, HW=HW,
                               mask_c_tail=mask_c_tail)

    # Explicit scoped-VMEM request sized from the actual working set.
    vmem_limit = min(max(int(vmem_est * 1.25) + (2 << 20), 16 << 20), 40 << 20)

    out_flat = pl.pallas_call(
        kernel,
        out_shape=jax.ShapeDtypeStruct((N, HW), x.dtype),
        grid_spec=pltpu.PrefetchScalarGridSpec(
            num_scalar_prefetch=0,
            grid=(pl.cdiv(N, Nb), pl.cdiv(C, Cb)),
            in_specs=[
                # streamed input chunks: (batch block, channel chunk, all HW)
                pl.BlockSpec((Nb, Cb, HW), lambda n, c: (n, c, 0)),
                # conv matrices: constant index_map -> resident in VMEM
                pl.BlockSpec((2, HW, HW), lambda n, c: (0, 0, 0)),
            ],
            out_specs=pl.BlockSpec((Nb, HW), lambda n, c: (n, 0)),
            scratch_shapes=[pltpu.VMEM((Nb, HW), jnp.float32),   # running sum
                            pltpu.VMEM((Nb, HW), jnp.float32)],  # running max
        ),
        compiler_params=pltpu.CompilerParams(
            dimension_semantics=("parallel", "arbitrary"),
            vmem_limit_bytes=vmem_limit,
        ),
    )(x_flat, conv_mat)
    return out_flat.reshape(N, 1, H, W)


def _reference(x, conv_weight, kernel_size=7):
    pad = kernel_size // 2
    avg = jnp.mean(x, axis=1, keepdims=True)
    mx = jnp.max(x, axis=1, keepdims=True)
    cat = jnp.concatenate([avg, mx], axis=1)
    conv = jax.lax.conv_general_dilated(
        cat, conv_weight,
        window_strides=(1, 1),
        padding=[(pad, pad), (pad, pad)],
        dimension_numbers=("NCHW", "OIHW", "NCHW"),
        precision=jax.lax.Precision.HIGHEST,
    )
    return jax.nn.sigmoid(conv)


if __name__ == "__main__":
    key = jax.random.PRNGKey(0)
    kx, kw = jax.random.split(key)

    N, C, H, W = 2, 4, 16, 16
    K = 7

    x = jax.random.normal(kx, (N, C, H, W), dtype=jnp.float32)
    # Deterministic conv weight init (nn.Conv2d(2, 1, 7, bias=False) -> (1, 2, 7, 7))
    fan_in = 2 * K * K
    bound = 1.0 / (fan_in ** 0.5)
    conv_weight = jax.random.uniform(
        kw, (1, 2, K, K), dtype=jnp.float32, minval=-bound, maxval=bound
    )

    out = spatial_attention(x, conv_weight, kernel_size=K)
    out = jax.block_until_ready(out)

    ref = _reference(x, conv_weight, kernel_size=K)
    assert out.shape == (N, 1, H, W)
    assert jnp.allclose(out, ref, atol=1e-5, rtol=1e-5), (
        f"max abs err = {jnp.max(jnp.abs(out - ref))}"
    )
    print("KERNEL_OK")
</pallas_src>

<mosaic_0001>
module attributes {stable_mosaic.version = 11 : i64} {
  func.func @_spatial_attn_kernel(%arg0: i32, %arg1: i32, %arg2: memref<2x4x256xf32, #tpu.memory_space<vmem>>, %arg3: memref<2x256x256xf32, #tpu.memory_space<vmem>>, %arg4: memref<2x256xf32, #tpu.memory_space<vmem>>, %arg5: memref<2x256xf32, #tpu.memory_space<vmem>>, %arg6: memref<2x256xf32, #tpu.memory_space<vmem>>) attributes {dimension_semantics = [#tpu.dimension_semantics<parallel>, #tpu.dimension_semantics<arbitrary>], iteration_bounds = array<i64: 1, 1>, scalar_prefetch = 0 : i64, scratch_operands = 2 : i64, tpu.core_type = #tpu.core_type<tc>, window_params = [{transform_indices = @transform_0, window_bounds = array<i64: 2, 4, 256>}, {pipeline_mode = #tpu.pipeline_mode<synchronous>, transform_indices = @transform_1, window_bounds = array<i64: 2, 256, 256>}, {transform_indices = @transform_2, window_bounds = array<i64: 2, 256>}]} {
    %c0 = arith.constant 0 : index
    %c0_0 = arith.constant 0 : index
    %c0_1 = arith.constant 0 : index
    %0 = vector.load %arg2[%c0, %c0_0, %c0_1] : memref<2x4x256xf32, #tpu.memory_space<vmem>>, vector<2x4x256xf32>
    %cst = arith.constant dense<0.000000e+00> : vector<2x256xf32>
    %1 = vector.multi_reduction <add>, %0, %cst [1] : vector<2x4x256xf32> to vector<2x256xf32>
    %cst_2 = arith.constant dense<0xFF800000> : vector<2x256xf32>
    %2 = vector.multi_reduction <maximumf>, %0, %cst_2 [1] : vector<2x4x256xf32> to vector<2x256xf32>
    %c0_i32 = arith.constant 0 : i32
    %3 = arith.cmpi eq, %arg1, %c0_i32 : i32
    %4 = arith.extui %3 : i1 to i32
    %c0_i32_3 = arith.constant 0 : i32
    %5 = arith.cmpi ne, %4, %c0_i32_3 : i32
    scf.if %5 {
      %c0_8 = arith.constant 0 : index
      %c0_9 = arith.constant 0 : index
      %12 = vector.load %arg5[%c0_8, %c0_9] : memref<2x256xf32, #tpu.memory_space<vmem>>, vector<2x256xf32>
      tpu.vector_store %arg5[%c0_8, %c0_9], %1 {strides = array<i32>} : memref<2x256xf32, #tpu.memory_space<vmem>>, vector<2x256xf32>,
      %c0_10 = arith.constant 0 : index
      %c0_11 = arith.constant 0 : index
      %13 = vector.load %arg6[%c0_10, %c0_11] : memref<2x256xf32, #tpu.memory_space<vmem>>, vector<2x256xf32>
      tpu.vector_store %arg6[%c0_10, %c0_11], %2 {strides = array<i32>} : memref<2x256xf32, #tpu.memory_space<vmem>>, vector<2x256xf32>,
    } else {
    }
    %c0_i32_4 = arith.constant 0 : i32
    %6 = arith.cmpi sgt, %arg1, %c0_i32_4 : i32
    %7 = arith.extui %6 : i1 to i32
    %c0_i32_5 = arith.constant 0 : i32
    %8 = arith.cmpi ne, %7, %c0_i32_5 : i32
    scf.if %8 {
      %c0_8 = arith.constant 0 : index
      %c0_9 = arith.constant 0 : index
      %12 = vector.load %arg5[%c0_8, %c0_9] : memref<2x256xf32, #tpu.memory_space<vmem>>, vector<2x256xf32>
      %13 = arith.addf %12, %1 : vector<2x256xf32>
      %c0_10 = arith.constant 0 : index
      %c0_11 = arith.constant 0 : index
      %14 = vector.load %arg5[%c0_10, %c0_11] : memref<2x256xf32, #tpu.memory_space<vmem>>, vector<2x256xf32>
      tpu.vector_store %arg5[%c0_10, %c0_11], %13 {strides = array<i32>} : memref<2x256xf32, #tpu.memory_space<vmem>>, vector<2x256xf32>,
      %c0_12 = arith.constant 0 : index
      %c0_13 = arith.constant 0 : index
      %15 = vector.load %arg6[%c0_12, %c0_13] : memref<2x256xf32, #tpu.memory_space<vmem>>, vector<2x256xf32>
      %16 = arith.maximumf %15, %2 : vector<2x256xf32>
      %c0_14 = arith.constant 0 : index
      %c0_15 = arith.constant 0 : index
      %17 = vector.load %arg6[%c0_14, %c0_15] : memref<2x256xf32, #tpu.memory_space<vmem>>, vector<2x256xf32>
      tpu.vector_store %arg6[%c0_14, %c0_15], %16 {strides = array<i32>} : memref<2x256xf32, #tpu.memory_space<vmem>>, vector<2x256xf32>,
    } else {
    }
    %c0_i32_6 = arith.constant 0 : i32
    %9 = arith.cmpi eq, %arg1, %c0_i32_6 : i32
    %10 = arith.extui %9 : i1 to i32
    %c0_i32_7 = arith.constant 0 : i32
    %11 = arith.cmpi ne, %10, %c0_i32_7 : i32
    scf.if %11 {
      %c0_8 = arith.constant 0 : index
      %c0_9 = arith.constant 0 : index
      %12 = vector.load %arg5[%c0_8, %c0_9] : memref<2x256xf32, #tpu.memory_space<vmem>>, vector<2x256xf32>
      %cst_10 = arith.constant 2.500000e-01 : f32
      %13 = vector.broadcast %cst_10 : f32 to vector<2x256xf32>
      %14 = arith.mulf %12, %13 : vector<2x256xf32>
      %c0_11 = arith.constant 0 : index
      %c0_12 = arith.constant 0 : index
      %c0_13 = arith.constant 0 : index
      %15 = vector.load %arg3[%c0_11, %c0_12, %c0_13] : memref<2x256x256xf32, #tpu.memory_space<vmem>>, vector<1x256x256xf32>
      %16 = vector.shape_cast %15 : vector<1x256x256xf32> to vector<256x256xf32>
      %cst_14 = arith.constant dense<0.000000e+00> : vector<2x256xf32>
      %17 = tpu.matmul %14, %16, %cst_14 {dimension_numbers = #tpu.dot_dimension_numbers<[1], [0], [0], [1], [0, 0, 1, 1], [], []>, precision = #tpu.contract_precision<fp32>} : vector<2x256xf32>, vector<256x256xf32>, vector<2x256xf32> -> vector<2x256xf32>
      %c0_15 = arith.constant 0 : index
      %c0_16 = arith.constant 0 : index
      %18 = vector.load %arg6[%c0_15, %c0_16] : memref<2x256xf32, #tpu.memory_space<vmem>>, vector<2x256xf32>
      %c1 = arith.constant 1 : index
      %c0_17 = arith.constant 0 : index
      %c0_18 = arith.constant 0 : index
      %19 = vector.load %arg3[%c1, %c0_17, %c0_18] : memref<2x256x256xf32, #tpu.memory_space<vmem>>, vector<1x256x256xf32>
      %20 = vector.shape_cast %19 : vector<1x256x256xf32> to vector<256x256xf32>
      %cst_19 = arith.constant dense<0.000000e+00> : vector<2x256xf32>
      %21 = tpu.matmul %18, %20, %cst_19 {dimension_numbers = #tpu.dot_dimension_numbers<[1], [0], [0], [1], [0, 0, 1, 1], [], []>, precision = #tpu.contract_precision<fp32>} : vector<2x256xf32>, vector<256x256xf32>, vector<2x256xf32> -> vector<2x256xf32>
      %22 = arith.addf %17, %21 : vector<2x256xf32>
      %23 = arith.negf %22 : vector<2x256xf32>
      %24 = math.exp %23 : vector<2x256xf32>
      %cst_20 = arith.constant 1.000000e+00 : f32
      %25 = vector.broadcast %cst_20 : f32 to vector<2x256xf32>
      %26 = arith.addf %25, %24 : vector<2x256xf32>
      %27 = arith.divf %25, %26 : vector<2x256xf32>
      %c0_21 = arith.constant 0 : index
      %c0_22 = arith.constant 0 : index
      %28 = vector.load %arg4[%c0_21, %c0_22] : memref<2x256xf32, #tpu.memory_space<vmem>>, vector<2x256xf32>
      tpu.vector_store %arg4[%c0_21, %c0_22], %27 {strides = array<i32>} : memref<2x256xf32, #tpu.memory_space<vmem>>, vector<2x256xf32>,
    } else {
    }
    return
  }
  func.func @transform_0(%arg0: i32, %arg1: i32) -> (i32, i32, i32) {
    %c0_i32 = arith.constant 0 : i32
    %c0_i32_0 = arith.constant 0 : i32
    return %arg0, %arg1, %c0_i32 : i32, i32, i32
  }
  func.func @transform_1(%arg0: i32, %arg1: i32) -> (i32, i32, i32) {
    %c0_i32 = arith.constant 0 : i32
    %c0_i32_0 = arith.constant 0 : i32
    %c0_i32_1 = arith.constant 0 : i32
    %c0_i32_2 = arith.constant 0 : i32
    return %c0_i32, %c0_i32_0, %c0_i32_1 : i32, i32, i32
  }
  func.func @transform_2(%arg0: i32, %arg1: i32) -> (i32, i32) {
    %c0_i32 = arith.constant 0 : i32
    %c0_i32_0 = arith.constant 0 : i32
    return %arg0, %c0_i32 : i32, i32
  }
}

</mosaic_0001>

<llo_original>
// kernel: tpu_custom_call.1
$region0: #{tpu_custom_call.1}
  #allocation0 [shape = 'u32[]', space=smem, size = 0x4, offset = 0x4, fixed_abs, tag = 'smem constant byte address 0x4 - core index']
  #allocation1 [shape = 'u32[144,128]{1,0:T(1,128)}', space=vmem, size = 0x12000, scoped, tag = 'internal scratch']
  #allocation2 [shape = 'f32[2,256]{1,0:T(2,128)}', space=vmem, size = 0x800, scoped, tag = 'scratch operand']
  #allocation3 [shape = 'f32[2,256]{1,0:T(2,128)}', space=vmem, size = 0x800, scoped, tag = 'scratch operand']
  %s0 = inlined_call_operand.hbm [shape: f32[2,4,256], index: 0, kind: input, shape index: {}]
  %s1 = inlined_call_operand.hbm [shape: f32[2,256,256], index: 1, kind: input, shape index: {}]
  %s2 = inlined_call_operand.hbm [shape: f32[2,256], index: 2, kind: output, shape index: {}]
  %s3 = sld [smem:[#allocation0]]
  $region38: #{tpu_custom_call.1} parent=0
    _
  %s5 = ssub.s32 1, %s3
  %s6 = scalar_select 0, %s5, %s3
  $region1: #{tpu_custom_call.1} parent=0
    #allocation4 [shape = 'u8[8192]{0}', space=vmem, size = 0x2000, scoped, tag = 'input window, operand 0, single buffered']
    #allocation5 [shape = 's32[1]{0}', space=sflag, size = 0x4, scoped, tag = 'scoped memory for tpu_custom_call.1']
    #allocation6 [shape = 's32[1]{0}', space=sflag, size = 0x4, scoped, tag = 'scoped memory for tpu_custom_call.1']
    #allocation7 [shape = 'u8[524288]{0}', space=vmem, size = 0x80000, scoped, tag = 'input window, operand 1, single buffered']
    #allocation8 [shape = 's32[1]{0}', space=sflag, size = 0x4, scoped, tag = 'scoped memory for tpu_custom_call.1']
    #allocation9 [shape = 'u8[2048]{0}', space=vmem, size = 0x800, scoped, tag = 'output window, operand 0, single buffered']
    %7 = vsyncpa [#allocation5], 0
    %8 = vsyncpa [#allocation8], 0
    %9 = vsyncpa [#allocation6], 0
    // Predicated region
    $region2: #{tpu_custom_call.1} parent=1 // pred_check
      _
    $region3: #{tpu_custom_call.1} parent=1 // pred_check_branch
      %11 = sbr.rel (0) target = $region5
    $region4: #{tpu_custom_call.1} parent=1 // pred_region
      %s13 = ssub.s32 256, 256
      %14 = vsyncadd [#allocation5], %s13
      %s15 = sshll.u32 [#allocation4], 4
      %s16 = int_to_ptr.vmem [resolvable:$true] %s15
      %21 = dma.hbm_to_vmem [thread:$0]  %s0, 256, %s16, [#allocation5], 128, 128, 8
    $region5: #{tpu_custom_call.1} parent=1 // pred_fallthru
      _
    // Predicated region
    $region6: #{tpu_custom_call.1} parent=1 // pred_check
      _
    $region7: #{tpu_custom_call.1} parent=1 // pred_check_branch
      %23 = sbr.rel (0) target = $region9
    $region8: #{tpu_custom_call.1} parent=1 // pred_region
      %s25 = ssub.s32 16384, 16384
      %26 = vsyncadd [#allocation8], %s25
      %s27 = sshll.u32 [#allocation7], 4
      %s28 = int_to_ptr.vmem [resolvable:$true] %s27
      %33 = dma.hbm_to_vmem [thread:$0]  %s1, 16384, %s28, [#allocation8], 256, 256, 16
    $region9: #{tpu_custom_call.1} parent=1 // pred_fallthru
      _
    // Predicated region
    $region10: #{tpu_custom_call.1} parent=1 // pred_check
      _
    $region11: #{tpu_custom_call.1} parent=1 // pred_check_branch
      %35 = sbr.rel (0) target = $region13
    $region12: #{tpu_custom_call.1} parent=1 // pred_region
      %36 = dma.done [#allocation5], 256
    $region13: #{tpu_custom_call.1} parent=1 // pred_fallthru
      _
    // Predicated region
    $region14: #{tpu_custom_call.1} parent=1 // pred_check
      _
    $region15: #{tpu_custom_call.1} parent=1 // pred_check_branch
      %38 = sbr.rel (0) target = $region17
    $region16: #{tpu_custom_call.1} parent=1 // pred_region
      %39 = dma.done [#allocation8], 16384
    $region17: #{tpu_custom_call.1} parent=1 // pred_fallthru
      _
    %v40 = vld [vmem:[#allocation4] sm:$0xff]
    %v41 = vld [vmem:[#allocation4 + $0x8] sm:$0xff]
    %v44 = vcombine.high %v40, %v40
    %v45 = vcombine.high %v41, %v41
    %vm48 = vcmask 1043456
    %v49 = vsel %vm48, %v40, 0.0
    %v50 = vrot.slane %v49, 4
    %v51 = vadd.f32 %v49, %v50
    %v52 = vrot.slane %v51, 2
    %v53 = vadd.f32 %v51, %v52
    %v54 = vrot.slane %v53, 1
    %v55 = vadd.f32 %v53, %v54
    %v56 = vsel %vm48, %v44, 0.0
    %v57 = vrot.slane %v56, 4
    %v58 = vadd.f32 %v56, %v57
    %v59 = vrot.slane %v58, 2
    %v60 = vadd.f32 %v58, %v59
    %v61 = vrot.slane %v60, 1
    %v62 = vadd.f32 %v60, %v61
    %v63 = vsel %vm48, %v41, 0.0
    %v64 = vrot.slane %v63, 4
    %v65 = vadd.f32 %v63, %v64
    %v66 = vrot.slane %v65, 2
    %v67 = vadd.f32 %v65, %v66
    %v68 = vrot.slane %v67, 1
    %v69 = vadd.f32 %v67, %v68
    %v70 = vsel %vm48, %v45, 0.0
    %v71 = vrot.slane %v70, 4
    %v72 = vadd.f32 %v70, %v71
    %v73 = vrot.slane %v72, 2
    %v74 = vadd.f32 %v72, %v73
    %v75 = vrot.slane %v74, 1
    %v76 = vadd.f32 %v74, %v75
    %v77 = vsel %vm48, %v40, -inf
    %v78 = vrot.slane %v77, 4
    %v79 = vmax.f32 %v77, %v78
    %v80 = vrot.slane %v79, 2
    %v81 = vmax.f32 %v79, %v80
    %v82 = vrot.slane %v81, 1
    %v83 = vmax.f32 %v81, %v82
    %v84 = vsel %vm48, %v44, -inf
    %v85 = vrot.slane %v84, 4
    %v86 = vmax.f32 %v84, %v85
    %v87 = vrot.slane %v86, 2
    %v88 = vmax.f32 %v86, %v87
    %v89 = vrot.slane %v88, 1
    %v90 = vmax.f32 %v88, %v89
    %v91 = vsel %vm48, %v41, -inf
    %v92 = vrot.slane %v91, 4
    %v93 = vmax.f32 %v91, %v92
    %v94 = vrot.slane %v93, 2
    %v95 = vmax.f32 %v93, %v94
    %v96 = vrot.slane %v95, 1
    %v97 = vmax.f32 %v95, %v96
    %v98 = vsel %vm48, %v45, -inf
    %v99 = vrot.slane %v98, 4
    %v100 = vmax.f32 %v98, %v99
    %v101 = vrot.slane %v100, 2
    %v102 = vmax.f32 %v100, %v101
    %v103 = vrot.slane %v102, 1
    %v104 = vmax.f32 %v102, %v103
    %p105 = scmp.eq.s32.totalorder 0, 0
    // Predicated region
    $region18: #{tpu_custom_call.1} parent=1 // pred_check
      %p106 = pneg %p105
    $region19: #{tpu_custom_call.1} parent=1 // pred_check_branch
      %108 = sbr.rel (%p106) target = $region21
    $region20: #{tpu_custom_call.1} parent=1 // pred_region
      %v113 = vcombine.low %v55, %v62
      %v115 = vunpack.c.l.s4 1983009808
      %v116 = vunpack.c.0.s8 %v115
      %v117 = vlaneseq
      %v118 = vshrl.u32 %v117, 7
      %v119 = vsub.s32 %v116, %v118
      %v120 = vrot.slane %v113, %v119
      %v121 = vcombine.low %v69, %v76
      %v123 = vunpack.c.l.s4 1983009808
      %v124 = vunpack.c.0.s8 %v123
      %v125 = vlaneseq
      %v126 = vshrl.u32 %v125, 7
      %v127 = vsub.s32 %v124, %v126
      %v128 = vrot.slane %v121, %v127
      %vm129 = vcmask 1044484
      %v130 = vsel %vm129, %v120, %v120
      %vm131 = vcmask 1046534
      %v132 = vsel %vm131, %v120, %v130
      %v133 = vrot.slane %v128, 7
      %vm134 = vcmask 1041409
      %v135 = vsel %vm134, %v133, %v132
      %vm136 = vcmask 1043459
      %v137 = vsel %vm136, %v133, %v135
      %vm138 = vcmask 1045509
      %v139 = vsel %vm138, %v133, %v137
      %vm140 = vcmask 1047559
      %v141 = vsel %vm140, %v133, %v139
      %143 = vst [vmem:[#allocation2] sm:$0xf] %v141
      %v148 = vcombine.low %v83, %v90
      %v150 = vunpack.c.l.s4 1983009808
      %v151 = vunpack.c.0.s8 %v150
      %v152 = vlaneseq
      %v153 = vshrl.u32 %v152, 7
      %v154 = vsub.s32 %v151, %v153
      %v155 = vrot.slane %v148, %v154
      %v156 = vcombine.low %v97, %v104
      %v158 = vunpack.c.l.s4 1983009808
      %v159 = vunpack.c.0.s8 %v158
      %v160 = vlaneseq
      %v161 = vshrl.u32 %v160, 7
      %v162 = vsub.s32 %v159, %v161
      %v163 = vrot.slane %v156, %v162
      %v164 = vsel %vm129, %v155, %v155
      %v165 = vsel %vm131, %v155, %v164
      %v166 = vrot.slane %v163, 7
      %v167 = vsel %vm134, %v166, %v165
      %v168 = vsel %vm136, %v166, %v167
      %v169 = vsel %vm138, %v166, %v168
      %v170 = vsel %vm140, %v166, %v169
      %172 = vst [vmem:[#allocation3] sm:$0xf] %v170
    $region21: #{tpu_custom_call.1} parent=1 // pred_fallthru
      _
    %p173 = scmp.gt.s32.totalorder 0, 0
    // Predicated region
    $region22: #{tpu_custom_call.1} parent=1 // pred_check
      %p174 = pneg %p173
    $region23: #{tpu_custom_call.1} parent=1 // pred_check_branch
      %176 = sbr.rel (%p174) target = $region25
    $region24: #{tpu_custom_call.1} parent=1 // pred_region
      %v177 = vld [vmem:[#allocation2] sm:$0xf]
      %v182 = vcombine.low %v55, %v62
      %v184 = vunpack.c.l.s4 1983009808
      %v185 = vunpack.c.0.s8 %v184
      %v186 = vlaneseq
      %v187 = vshrl.u32 %v186, 7
      %v188 = vsub.s32 %v185, %v187
      %v189 = vrot.slane %v182, %v188
      %v190 = vcombine.low %v69, %v76
      %v192 = vunpack.c.l.s4 1983009808
      %v193 = vunpack.c.0.s8 %v192
      %v194 = vlaneseq
      %v195 = vshrl.u32 %v194, 7
      %v196 = vsub.s32 %v193, %v195
      %v197 = vrot.slane %v190, %v196
      %vm198 = vcmask 1044484
      %v199 = vsel %vm198, %v189, %v189
      %vm200 = vcmask 1046534
      %v201 = vsel %vm200, %v189, %v199
      %v202 = vrot.slane %v197, 7
      %vm203 = vcmask 1041409
      %v204 = vsel %vm203, %v202, %v201
      %vm205 = vcmask 1043459
      %v206 = vsel %vm205, %v202, %v204
      %vm207 = vcmask 1045509
      %v208 = vsel %vm207, %v202, %v206
      %vm209 = vcmask 1047559
      %v210 = vsel %vm209, %v202, %v208
      %v212 = vadd.f32 %v177, %v210
      %213 = vst [vmem:[#allocation2] sm:$0xf] %v212
      %v214 = vld [vmem:[#allocation3] sm:$0xf]
      %v219 = vcombine.low %v83, %v90
      %v221 = vunpack.c.l.s4 1983009808
      %v222 = vunpack.c.0.s8 %v221
      %v223 = vlaneseq
      %v224 = vshrl.u32 %v223, 7
      %v225 = vsub.s32 %v222, %v224
      %v226 = vrot.slane %v219, %v225
      %v227 = vcombine.low %v97, %v104
      %v229 = vunpack.c.l.s4 1983009808
      %v230 = vunpack.c.0.s8 %v229
      %v231 = vlaneseq
      %v232 = vshrl.u32 %v231, 7
      %v233 = vsub.s32 %v230, %v232
      %v234 = vrot.slane %v227, %v233
      %v235 = vsel %vm198, %v226, %v226
      %v236 = vsel %vm200, %v226, %v235
      %v237 = vrot.slane %v234, 7
      %v238 = vsel %vm203, %v237, %v236
      %v239 = vsel %vm205, %v237, %v238
      %v240 = vsel %vm207, %v237, %v239
      %v241 = vsel %vm209, %v237, %v240
      %v243 = vmax.f32 %v214, %v241
      %244 = vst [vmem:[#allocation3] sm:$0xf] %v243
    $region25: #{tpu_custom_call.1} parent=1 // pred_fallthru
      _
    // Predicated region
    $region26: #{tpu_custom_call.1} parent=1 // pred_check
      %p245 = pneg %p105
    $region27: #{tpu_custom_call.1} parent=1 // pred_check_branch
      %247 = sbr.rel (%p245) target = $region29
    $region28: #{tpu_custom_call.1} parent=1 // pred_region
      %v248 = vld [vmem:[#allocation2] sm:$0xf]
      %v249 = vmul.f32 %v248, 0.25
      %v250 = vld [vmem:[#allocation7] sm:$0xff]
      %v251 = vld [vmem:[#allocation7 + $0x8] sm:$0xff]
      %v252 = vld [vmem:[#allocation7 + $0x10] sm:$0xff]
      %v253 = vld [vmem:[#allocation7 + $0x18] sm:$0xff]
      %v254 = vld [vmem:[#allocation7 + $0x20] sm:$0xff]
      %v255 = vld [vmem:[#allocation7 + $0x28] sm:$0xff]
      %v256 = vld [vmem:[#allocation7 + $0x30] sm:$0xff]
      %v257 = vld [vmem:[#allocation7 + $0x38] sm:$0xff]
      %v258 = vld [vmem:[#allocation7 + $0x40] sm:$0xff]
      %v259 = vld [vmem:[#allocation7 + $0x48] sm:$0xff]
      %v260 = vld [vmem:[#allocation7 + $0x50] sm:$0xff]
      %v261 = vld [vmem:[#allocation7 + $0x58] sm:$0xff]
      %v262 = vld [vmem:[#allocation7 + $0x60] sm:$0xff]
      %v263 = vld [vmem:[#allocation7 + $0x68] sm:$0xff]
      %v264 = vld [vmem:[#allocation7 + $0x70] sm:$0xff]
      %v265 = vld [vmem:[#allocation7 + $0x78] sm:$0xff]
      %v266 = vld [vmem:[#allocation7 + $0x80] sm:$0xff]
      %v267 = vld [vmem:[#allocation7 + $0x88] sm:$0xff]
      %v268 = vld [vmem:[#allocation7 + $0x90] sm:$0xff]
      %v269 = vld [vmem:[#allocation7 + $0x98] sm:$0xff]
      %v270 = vld [vmem:[#allocation7 + $0xa0] sm:$0xff]
      %v271 = vld [vmem:[#allocation7 + $0xa8] sm:$0xff]
      %v272 = vld [vmem:[#allocation7 + $0xb0] sm:$0xff]
      %v273 = vld [vmem:[#allocation7 + $0xb8] sm:$0xff]
      %v274 = vld [vmem:[#allocation7 + $0xc0] sm:$0xff]
      %v275 = vld [vmem:[#allocation7 + $0xc8] sm:$0xff]
      %v276 = vld [vmem:[#allocation7 + $0xd0] sm:$0xff]
      %v277 = vld [vmem:[#allocation7 + $0xd8] sm:$0xff]
      %v278 = vld [vmem:[#allocation7 + $0xe0] sm:$0xff]
      %v279 = vld [vmem:[#allocation7 + $0xe8] sm:$0xff]
      %v280 = vld [vmem:[#allocation7 + $0xf0] sm:$0xff]
      %v281 = vld [vmem:[#allocation7 + $0xf8] sm:$0xff]
      %v282 = vld [vmem:[#allocation7 + $0x100] sm:$0xff]
      %v283 = vld [vmem:[#allocation7 + $0x108] sm:$0xff]
      %v284 = vld [vmem:[#allocation7 + $0x110] sm:$0xff]
      %v285 = vld [vmem:[#allocation7 + $0x118] sm:$0xff]
      %v286 = vld [vmem:[#allocation7 + $0x120] sm:$0xff]
      %v287 = vld [vmem:[#allocation7 + $0x128] sm:$0xff]
      %v288 = vld [vmem:[#allocation7 + $0x130] sm:$0xff]
      %v289 = vld [vmem:[#allocation7 + $0x138] sm:$0xff]
      %v290 = vld [vmem:[#allocation7 + $0x140] sm:$0xff]
      %v291 = vld [vmem:[#allocation7 + $0x148] sm:$0xff]
      %v292 = vld [vmem:[#allocation7 + $0x150] sm:$0xff]
      %v293 = vld [vmem:[#allocation7 + $0x158] sm:$0xff]
      %v294 = vld [vmem:[#allocation7 + $0x160] sm:$0xff]
      %v295 = vld [vmem:[#allocation7 + $0x168] sm:$0xff]
      %v296 = vld [vmem:[#allocation7 + $0x170] sm:$0xff]
      %v297 = vld [vmem:[#allocation7 + $0x178] sm:$0xff]
      %v298 = vld [vmem:[#allocation7 + $0x180] sm:$0xff]
      %v299 = vld [vmem:[#allocation7 + $0x188] sm:$0xff]
      %v300 = vld [vmem:[#allocation7 + $0x190] sm:$0xff]
      %v301 = vld [vmem:[#allocation7 + $0x198] sm:$0xff]
      %v302 = vld [vmem:[#allocation7 + $0x1a0] sm:$0xff]
      %v303 = vld [vmem:[#allocation7 + $0x1a8] sm:$0xff]
      %v304 = vld [vmem:[#allocation7 + $0x1b0] sm:$0xff]
      %v305 = vld [vmem:[#allocation7 + $0x1b8] sm:$0xff]
      %v306 = vld [vmem:[#allocation7 + $0x1c0] sm:$0xff]
      %v307 = vld [vmem:[#allocation7 + $0x1c8] sm:$0xff]
      %v308 = vld [vmem:[#allocation7 + $0x1d0] sm:$0xff]
      %v309 = vld [vmem:[#allocation7 + $0x1d8] sm:$0xff]
      %v310 = vld [vmem:[#allocation7 + $0x1e0] sm:$0xff]
      %v311 = vld [vmem:[#allocation7 + $0x1e8] sm:$0xff]
      %v312 = vld [vmem:[#allocation7 + $0x1f0] sm:$0xff]
      %v313 = vld [vmem:[#allocation7 + $0x1f8] sm:$0xff]
      %v314 = vld [vmem:[#allocation3] sm:$0xf]
      %s315 = scalar_lea.vmem [#allocation7], 512
      %v316 = vld [vmem:[%s315] sm:$0xff]
      %v317 = vld [vmem:[%s315 + $0x8] sm:$0xff]
      %v318 = vld [vmem:[%s315 + $0x10] sm:$0xff]
      %v319 = vld [vmem:[%s315 + $0x18] sm:$0xff]
      %v320 = vld [vmem:[%s315 + $0x20] sm:$0xff]
      %v321 = vld [vmem:[%s315 + $0x28] sm:$0xff]
      %v322 = vld [vmem:[%s315 + $0x30] sm:$0xff]
      %v323 = vld [vmem:[%s315 + $0x38] sm:$0xff]
      %v324 = vld [vmem:[%s315 + $0x40] sm:$0xff]
      %v325 = vld [vmem:[%s315 + $0x48] sm:$0xff]
      %v326 = vld [vmem:[%s315 + $0x50] sm:$0xff]
      %v327 = vld [vmem:[%s315 + $0x58] sm:$0xff]
      %v328 = vld [vmem:[%s315 + $0x60] sm:$0xff]
      %v329 = vld [vmem:[%s315 + $0x68] sm:$0xff]
      %v330 = vld [vmem:[%s315 + $0x70] sm:$0xff]
      %v331 = vld [vmem:[%s315 + $0x78] sm:$0xff]
      %v332 = vld [vmem:[%s315 + $0x80] sm:$0xff]
      %v333 = vld [vmem:[%s315 + $0x88] sm:$0xff]
      %v334 = vld [vmem:[%s315 + $0x90] sm:$0xff]
      %v335 = vld [vmem:[%s315 + $0x98] sm:$0xff]
      %v336 = vld [vmem:[%s315 + $0xa0] sm:$0xff]
      %v337 = vld [vmem:[%s315 + $0xa8] sm:$0xff]
      %v338 = vld [vmem:[%s315 + $0xb0] sm:$0xff]
      %v339 = vld [vmem:[%s315 + $0xb8] sm:$0xff]
      %v340 = vld [vmem:[%s315 + $0xc0] sm:$0xff]
      %v341 = vld [vmem:[%s315 + $0xc8] sm:$0xff]
      %v342 = vld [vmem:[%s315 + $0xd0] sm:$0xff]
      %v343 = vld [vmem:[%s315 + $0xd8] sm:$0xff]
      %v344 = vld [vmem:[%s315 + $0xe0] sm:$0xff]
      %v345 = vld [vmem:[%s315 + $0xe8] sm:$0xff]
      %v346 = vld [vmem:[%s315 + $0xf0] sm:$0xff]
      %v347 = vld [vmem:[%s315 + $0xf8] sm:$0xff]
      %v348 = vld [vmem:[%s315 + $0x100] sm:$0xff]
      %v349 = vld [vmem:[%s315 + $0x108] sm:$0xff]
      %v350 = vld [vmem:[%s315 + $0x110] sm:$0xff]
      %v351 = vld [vmem:[%s315 + $0x118] sm:$0xff]
      %v352 = vld [vmem:[%s315 + $0x120] sm:$0xff]
      %v353 = vld [vmem:[%s315 + $0x128] sm:$0xff]
      %v354 = vld [vmem:[%s315 + $0x130] sm:$0xff]
      %v355 = vld [vmem:[%s315 + $0x138] sm:$0xff]
      %v356 = vld [vmem:[%s315 + $0x140] sm:$0xff]
      %v357 = vld [vmem:[%s315 + $0x148] sm:$0xff]
      %v358 = vld [vmem:[%s315 + $0x150] sm:$0xff]
      %v359 = vld [vmem:[%s315 + $0x158] sm:$0xff]
      %v360 = vld [vmem:[%s315 + $0x160] sm:$0xff]
      %v361 = vld [vmem:[%s315 + $0x168] sm:$0xff]
      %v362 = vld [vmem:[%s315 + $0x170] sm:$0xff]
      %v363 = vld [vmem:[%s315 + $0x178] sm:$0xff]
      %v364 = vld [vmem:[%s315 + $0x180] sm:$0xff]
      %v365 = vld [vmem:[%s315 + $0x188] sm:$0xff]
      %v366 = vld [vmem:[%s315 + $0x190] sm:$0xff]
      %v367 = vld [vmem:[%s315 + $0x198] sm:$0xff]
      %v368 = vld [vmem:[%s315 + $0x1a0] sm:$0xff]
      %v369 = vld [vmem:[%s315 + $0x1a8] sm:$0xff]
      %v370 = vld [vmem:[%s315 + $0x1b0] sm:$0xff]
      %v371 = vld [vmem:[%s315 + $0x1b8] sm:$0xff]
      %v372 = vld [vmem:[%s315 + $0x1c0] sm:$0xff]
      %v373 = vld [vmem:[%s315 + $0x1c8] sm:$0xff]
      %v374 = vld [vmem:[%s315 + $0x1d0] sm:$0xff]
      %v375 = vld [vmem:[%s315 + $0x1d8] sm:$0xff]
      %v376 = vld [vmem:[%s315 + $0x1e0] sm:$0xff]
      %v377 = vld [vmem:[%s315 + $0x1e8] sm:$0xff]
      %v378 = vld [vmem:[%s315 + $0x1f0] sm:$0xff]
      %v379 = vld [vmem:[%s315 + $0x1f8] sm:$0xff]
      %v382 = vunpack.c.l.s4 1983009808
      %v383 = vunpack.c.0.s8 %v382
      %v384 = vlaneseq
      %v385 = vshrl.u32 %v384, 7
      %v386 = vsub.s32 %v383, %v385
      %v387 = vrot.slane %v314, %v386
      %v388 = vcombine.high %v387, %v387
      %v391 = vand.u32 %v347, 4294901760
      %392 = vmatprep.subr.mxu0 %v391
      %v393 = vand.u32 %v346, 4294901760
      %394 = vmatpush1.msra.mxu0 %v393
      %v395 = vand.u32 %v345, 4294901760
      %396 = vmatprep.subr.mxu0 %v395
      %v397 = vand.u32 %v344, 4294901760
      %398 = vmatpush1.msra.mxu0 %v397
      %v399 = vand.u32 %v343, 4294901760
      %400 = vmatprep.subr.mxu0 %v399
      %v401 = vand.u32 %v342, 4294901760
      %402 = vmatpush1.msra.mxu0 %v401
      %v403 = vand.u32 %v341, 4294901760
      %404 = vmatprep.subr.mxu0 %v403
      %v405 = vand.u32 %v340, 4294901760
      %406 = vmatpush1.msra.mxu0 %v405
      %v407 = vand.u32 %v339, 4294901760
      %408 = vmatprep.subr.mxu0 %v407
      %v409 = vand.u32 %v338, 4294901760
      %410 = vmatpush1.msra.mxu0 %v409
      %v411 = vand.u32 %v337, 4294901760
      %412 = vmatprep.subr.mxu0 %v411
      %v413 = vand.u32 %v336, 4294901760
      %414 = vmatpush1.msra.mxu0 %v413
      %v415 = vand.u32 %v335, 4294901760
      %416 = vmatprep.subr.mxu0 %v415
      %v417 = vand.u32 %v334, 4294901760
      %418 = vmatpush1.msra.mxu0 %v417
      %v419 = vand.u32 %v333, 4294901760
      %420 = vmatprep.subr.mxu0 %v419
      %v421 = vand.u32 %v332, 4294901760
      %422 = vmatpush1.msra.mxu0 %v421
      %v423 = vand.u32 %v331, 4294901760
      %424 = vmatprep.subr.mxu0 %v423
      %v425 = vand.u32 %v330, 4294901760
      %426 = vmatpush1.msra.mxu0 %v425
      %v427 = vand.u32 %v329, 4294901760
      %428 = vmatprep.subr.mxu0 %v427
      %v429 = vand.u32 %v328, 4294901760
      %430 = vmatpush1.msra.mxu0 %v429
      %v431 = vand.u32 %v327, 4294901760
      %432 = vmatprep.subr.mxu0 %v431
      %v433 = vand.u32 %v326, 4294901760
      %434 = vmatpush1.msra.mxu0 %v433
      %v435 = vand.u32 %v325, 4294901760
      %436 = vmatprep.subr.mxu0 %v435
      %v437 = vand.u32 %v324, 4294901760
      %438 = vmatpush1.msra.mxu0 %v437
      %v439 = vand.u32 %v323, 4294901760
      %440 = vmatprep.subr.mxu0 %v439
      %v441 = vand.u32 %v322, 4294901760
      %442 = vmatpush1.msra.mxu0 %v441
      %v443 = vand.u32 %v321, 4294901760
      %444 = vmatprep.subr.mxu0 %v443
      %v445 = vand.u32 %v320, 4294901760
      %446 = vmatpush1.msra.mxu0 %v445
      %v447 = vand.u32 %v319, 4294901760
      %448 = vmatprep.subr.mxu0 %v447
      %v449 = vand.u32 %v318, 4294901760
      %450 = vmatpush1.msra.mxu0 %v449
      %v451 = vand.u32 %v317, 4294901760
      %452 = vmatprep.subr.mxu0 %v451
      %v453 = vand.u32 %v316, 4294901760
      %454 = vmatpush1.msra.mxu0 %v453
      %v455 = vand.u32 %v379, 4294901760
      %456 = vmatprep.subr.mxu0 %v455
      %v457 = vand.u32 %v378, 4294901760
      %458 = vmatpush2.msra.mxu0 %v457
      %v459 = vand.u32 %v377, 4294901760
      %460 = vmatprep.subr.mxu0 %v459
      %v461 = vand.u32 %v376, 4294901760
      %462 = vmatpush2.msra.mxu0 %v461
      %v463 = vand.u32 %v375, 4294901760
      %464 = vmatprep.subr.mxu0 %v463
      %v465 = vand.u32 %v374, 4294901760
      %466 = vmatpush2.msra.mxu0 %v465
      %v467 = vand.u32 %v373, 4294901760
      %468 = vmatprep.subr.mxu0 %v467
      %v469 = vand.u32 %v372, 4294901760
      %470 = vmatpush2.msra.mxu0 %v469
      %v471 = vand.u32 %v371, 4294901760
      %472 = vmatprep.subr.mxu0 %v471
      %v473 = vand.u32 %v370, 4294901760
      %474 = vmatpush2.msra.mxu0 %v473
      %v475 = vand.u32 %v369, 4294901760
      %476 = vmatprep.subr.mxu0 %v475
      %v477 = vand.u32 %v368, 4294901760
      %478 = vmatpush2.msra.mxu0 %v477
      %v479 = vand.u32 %v367, 4294901760
      %480 = vmatprep.subr.mxu0 %v479
      %v481 = vand.u32 %v366, 4294901760
      %482 = vmatpush2.msra.mxu0 %v481
      %v483 = vand.u32 %v365, 4294901760
      %484 = vmatprep.subr.mxu0 %v483
      %v485 = vand.u32 %v364, 4294901760
      %486 = vmatpush2.msra.mxu0 %v485
      %v487 = vand.u32 %v363, 4294901760
      %488 = vmatprep.subr.mxu0 %v487
      %v489 = vand.u32 %v362, 4294901760
      %490 = vmatpush2.msra.mxu0 %v489
      %v491 = vand.u32 %v361, 4294901760
      %492 = vmatprep.subr.mxu0 %v491
      %v493 = vand.u32 %v360, 4294901760
      %494 = vmatpush2.msra.mxu0 %v493
      %v495 = vand.u32 %v359, 4294901760
      %496 = vmatprep.subr.mxu0 %v495
      %v497 = vand.u32 %v358, 4294901760
      %498 = vmatpush2.msra.mxu0 %v497
      %v499 = vand.u32 %v357, 4294901760
      %500 = vmatprep.subr.mxu0 %v499
      %v501 = vand.u32 %v356, 4294901760
      %502 = vmatpush2.msra.mxu0 %v501
      %v503 = vand.u32 %v355, 4294901760
      %504 = vmatprep.subr.mxu0 %v503
      %v505 = vand.u32 %v354, 4294901760
      %506 = vmatpush2.msra.mxu0 %v505
      %v507 = vand.u32 %v353, 4294901760
      %508 = vmatprep.subr.mxu0 %v507
      %v509 = vand.u32 %v352, 4294901760
      %510 = vmatpush2.msra.mxu0 %v509
      %v511 = vand.u32 %v351, 4294901760
      %512 = vmatprep.subr.mxu0 %v511
      %v513 = vand.u32 %v350, 4294901760
      %514 = vmatpush2.msra.mxu0 %v513
      %v515 = vand.u32 %v349, 4294901760
      %516 = vmatprep.subr.mxu0 %v515
      %v517 = vand.u32 %v348, 4294901760
      %518 = vmatpush2.msra.mxu0 %v517
      %v519 = vand.u32 %v388, 4294901760
      %v520 = vsub.f32 %v388, %v519
      %v521 = vand.u32 %v520, 4294901760
      %v522 = vsub.f32 %v520, %v521
      %v523 = vand.u32 %v522, 4294901760
      %524 = vmatprep.mubr.f32.mxu0 %v523
      %v525 = vand.u32 %v387, 4294901760
      %v526 = vsub.f32 %v387, %v525
      %v527 = vand.u32 %v526, 4294901760
      %v528 = vsub.f32 %v526, %v527
      %v529 = vand.u32 %v528, 4294901760
      %530 = vmatmul.mubr.f32.gmra.mxu0 %v529
      %v531 = vpop.f32.mrf.mxu0
      %v532 = vadd.f32 0.0, %v531
      %v533 = vpop.f32.mrf.mxu0
      %v534 = vadd.f32 0.0, %v533
      %535 = vdwg.mxu0
      %v536 = vand.u32 %v347, 4294901760
      %v537 = vsub.f32 %v347, %v536
      %v538 = vand.u32 %v537, 4294901760
      %v539 = vsub.f32 %v537, %v538
      %v540 = vand.u32 %v539, 4294901760
      %541 = vmatprep.subr.mxu0 %v540
      %v542 = vand.u32 %v346, 4294901760
      %v543 = vsub.f32 %v346, %v542
      %v544 = vand.u32 %v543, 4294901760
      %v545 = vsub.f32 %v543, %v544
      %v546 = vand.u32 %v545, 4294901760
      %547 = vmatpush1.msra.mxu0 %v546
      %v548 = vand.u32 %v345, 4294901760
      %v549 = vsub.f32 %v345, %v548
      %v550 = vand.u32 %v549, 4294901760
      %v551 = vsub.f32 %v549, %v550
      %v552 = vand.u32 %v551, 4294901760
      %553 = vmatprep.subr.mxu0 %v552
      %v554 = vand.u32 %v344, 4294901760
      %v555 = vsub.f32 %v344, %v554
      %v556 = vand.u32 %v555, 4294901760
      %v557 = vsub.f32 %v555, %v556
      %v558 = vand.u32 %v557, 4294901760
      %559 = vmatpush1.msra.mxu0 %v558
      %v560 = vand.u32 %v343, 4294901760
      %v561 = vsub.f32 %v343, %v560
      %v562 = vand.u32 %v561, 4294901760
      %v563 = vsub.f32 %v561, %v562
      %v564 = vand.u32 %v563, 4294901760
      %565 = vmatprep.subr.mxu0 %v564
      %v566 = vand.u32 %v342, 4294901760
      %v567 = vsub.f32 %v342, %v566
      %v568 = vand.u32 %v567, 4294901760
      %v569 = vsub.f32 %v567, %v568
      %v570 = vand.u32 %v569, 4294901760
      %571 = vmatpush1.msra.mxu0 %v570
      %v572 = vand.u32 %v341, 4294901760
      %v573 = vsub.f32 %v341, %v572
      %v574 = vand.u32 %v573, 4294901760
      %v575 = vsub.f32 %v573, %v574
      %v576 = vand.u32 %v575, 4294901760
      %577 = vmatprep.subr.mxu0 %v576
      %v578 = vand.u32 %v340, 4294901760
      %v579 = vsub.f32 %v340, %v578
      %v580 = vand.u32 %v579, 4294901760
      %v581 = vsub.f32 %v579, %v580
      %v582 = vand.u32 %v581, 4294901760
      %583 = vmatpush1.msra.mxu0 %v582
      %v584 = vand.u32 %v339, 4294901760
      %v585 = vsub.f32 %v339, %v584
      %v586 = vand.u32 %v585, 4294901760
      %v587 = vsub.f32 %v585, %v586
      %v588 = vand.u32 %v587, 4294901760
      %589 = vmatprep.subr.mxu0 %v588
      %v590 = vand.u32 %v338, 4294901760
      %v591 = vsub.f32 %v338, %v590
      %v592 = vand.u32 %v591, 4294901760
      %v593 = vsub.f32 %v591, %v592
      %v594 = vand.u32 %v593, 4294901760
      %595 = vmatpush1.msra.mxu0 %v594
      %v596 = vand.u32 %v337, 4294901760
      %v597 = vsub.f32 %v337, %v596
      %v598 = vand.u32 %v597, 4294901760
      %v599 = vsub.f32 %v597, %v598
      %v600 = vand.u32 %v599, 4294901760
      %601 = vmatprep.subr.mxu0 %v600
      %v602 = vand.u32 %v336, 4294901760
      %v603 = vsub.f32 %v336, %v602
      %v604 = vand.u32 %v603, 4294901760
      %v605 = vsub.f32 %v603, %v604
      %v606 = vand.u32 %v605, 4294901760
      %607 = vmatpush1.msra.mxu0 %v606
      %v608 = vand.u32 %v335, 4294901760
      %v609 = vsub.f32 %v335, %v608
      %v610 = vand.u32 %v609, 4294901760
      %v611 = vsub.f32 %v609, %v610
      %v612 = vand.u32 %v611, 4294901760
      %613 = vmatprep.subr.mxu0 %v612
      %v614 = vand.u32 %v334, 4294901760
      %v615 = vsub.f32 %v334, %v614
      %v616 = vand.u32 %v615, 4294901760
      %v617 = vsub.f32 %v615, %v616
      %v618 = vand.u32 %v617, 4294901760
      %619 = vmatpush1.msra.mxu0 %v618
      %v620 = vand.u32 %v333, 4294901760
      %v621 = vsub.f32 %v333, %v620
      %v622 = vand.u32 %v621, 4294901760
      %v623 = vsub.f32 %v621, %v622
      %v624 = vand.u32 %v623, 4294901760
      %625 = vmatprep.subr.mxu0 %v624
      %v626 = vand.u32 %v332, 4294901760
      %v627 = vsub.f32 %v332, %v626
      %v628 = vand.u32 %v627, 4294901760
      %v629 = vsub.f32 %v627, %v628
      %v630 = vand.u32 %v629, 4294901760
      %631 = vmatpush1.msra.mxu0 %v630
      %v632 = vand.u32 %v331, 4294901760
      %v633 = vsub.f32 %v331, %v632
      %v634 = vand.u32 %v633, 4294901760
      %v635 = vsub.f32 %v633, %v634
      %v636 = vand.u32 %v635, 4294901760
      %637 = vmatprep.subr.mxu0 %v636
      %v638 = vand.u32 %v330, 4294901760
      %v639 = vsub.f32 %v330, %v638
      %v640 = vand.u32 %v639, 4294901760
      %v641 = vsub.f32 %v639, %v640
      %v642 = vand.u32 %v641, 4294901760
      %643 = vmatpush1.msra.mxu0 %v642
      %v644 = vand.u32 %v329, 4294901760
      %v645 = vsub.f32 %v329, %v644
      %v646 = vand.u32 %v645, 4294901760
      %v647 = vsub.f32 %v645, %v646
      %v648 = vand.u32 %v647, 4294901760
      %649 = vmatprep.subr.mxu0 %v648
      %v650 = vand.u32 %v328, 4294901760
      %v651 = vsub.f32 %v328, %v650
      %v652 = vand.u32 %v651, 4294901760
      %v653 = vsub.f32 %v651, %v652
      %v654 = vand.u32 %v653, 4294901760
      %655 = vmatpush1.msra.mxu0 %v654
      %v656 = vand.u32 %v327, 4294901760
      %v657 = vsub.f32 %v327, %v656
      %v658 = vand.u32 %v657, 4294901760
      %v659 = vsub.f32 %v657, %v658
      %v660 = vand.u32 %v659, 4294901760
      %661 = vmatprep.subr.mxu0 %v660
      %v662 = vand.u32 %v326, 4294901760
      %v663 = vsub.f32 %v326, %v662
      %v664 = vand.u32 %v663, 4294901760
      %v665 = vsub.f32 %v663, %v664
      %v666 = vand.u32 %v665, 4294901760
      %667 = vmatpush1.msra.mxu0 %v666
      %v668 = vand.u32 %v325, 4294901760
      %v669 = vsub.f32 %v325, %v668
      %v670 = vand.u32 %v669, 4294901760
      %v671 = vsub.f32 %v669, %v670
      %v672 = vand.u32 %v671, 4294901760
      %673 = vmatprep.subr.mxu0 %v672
      %v674 = vand.u32 %v324, 4294901760
      %v675 = vsub.f32 %v324, %v674
      %v676 = vand.u32 %v675, 4294901760
      %v677 = vsub.f32 %v675, %v676
      %v678 = vand.u32 %v677, 4294901760
      %679 = vmatpush1.msra.mxu0 %v678
      %v680 = vand.u32 %v323, 4294901760
      %v681 = vsub.f32 %v323, %v680
      %v682 = vand.u32 %v681, 4294901760
      %v683 = vsub.f32 %v681, %v682
      %v684 = vand.u32 %v683, 4294901760
      %685 = vmatprep.subr.mxu0 %v684
      %v686 = vand.u32 %v322, 4294901760
      %v687 = vsub.f32 %v322, %v686
      %v688 = vand.u32 %v687, 4294901760
      %v689 = vsub.f32 %v687, %v688
      %v690 = vand.u32 %v689, 4294901760
      %691 = vmatpush1.msra.mxu0 %v690
      %v692 = vand.u32 %v321, 4294901760
      %v693 = vsub.f32 %v321, %v692
      %v694 = vand.u32 %v693, 4294901760
      %v695 = vsub.f32 %v693, %v694
      %v696 = vand.u32 %v695, 4294901760
      %697 = vmatprep.subr.mxu0 %v696
      %v698 = vand.u32 %v320, 4294901760
      %v699 = vsub.f32 %v320, %v698
      %v700 = vand.u32 %v699, 4294901760
      %v701 = vsub.f32 %v699, %v700
      %v702 = vand.u32 %v701, 4294901760
      %703 = vmatpush1.msra.mxu0 %v702
      %v704 = vand.u32 %v319, 4294901760
      %v705 = vsub.f32 %v319, %v704
      %v706 = vand.u32 %v705, 4294901760
      %v707 = vsub.f32 %v705, %v706
      %v708 = vand.u32 %v707, 4294901760
      %709 = vmatprep.subr.mxu0 %v708
      %v710 = vand.u32 %v318, 4294901760
      %v711 = vsub.f32 %v318, %v710
      %v712 = vand.u32 %v711, 4294901760
      %v713 = vsub.f32 %v711, %v712
      %v714 = vand.u32 %v713, 4294901760
      %715 = vmatpush1.msra.mxu0 %v714
      %v716 = vand.u32 %v317, 4294901760
      %v717 = vsub.f32 %v317, %v716
      %v718 = vand.u32 %v717, 4294901760
      %v719 = vsub.f32 %v717, %v718
      %v720 = vand.u32 %v719, 4294901760
      %721 = vmatprep.subr.mxu0 %v720
      %v722 = vand.u32 %v316, 4294901760
      %v723 = vsub.f32 %v316, %v722
      %v724 = vand.u32 %v723, 4294901760
      %v725 = vsub.f32 %v723, %v724
      %v726 = vand.u32 %v725, 4294901760
      %727 = vmatpush1.msra.mxu0 %v726
      %v728 = vand.u32 %v379, 4294901760
      %v729 = vsub.f32 %v379, %v728
      %v730 = vand.u32 %v729, 4294901760
      %v731 = vsub.f32 %v729, %v730
      %v732 = vand.u32 %v731, 4294901760
      %733 = vmatprep.subr.mxu0 %v732
      %v734 = vand.u32 %v378, 4294901760
      %v735 = vsub.f32 %v378, %v734
      %v736 = vand.u32 %v735, 4294901760
      %v737 = vsub.f32 %v735, %v736
      %v738 = vand.u32 %v737, 4294901760
      %739 = vmatpush2.msra.mxu0 %v738
      %v740 = vand.u32 %v377, 4294901760
      %v741 = vsub.f32 %v377, %v740
      %v742 = vand.u32 %v741, 4294901760
      %v743 = vsub.f32 %v741, %v742
      %v744 = vand.u32 %v743, 4294901760
      %745 = vmatprep.subr.mxu0 %v744
      %v746 = vand.u32 %v376, 4294901760
      %v747 = vsub.f32 %v376, %v746
      %v748 = vand.u32 %v747, 4294901760
      %v749 = vsub.f32 %v747, %v748
      %v750 = vand.u32 %v749, 4294901760
      %751 = vmatpush2.msra.mxu0 %v750
      %v752 = vand.u32 %v375, 4294901760
      %v753 = vsub.f32 %v375, %v752
      %v754 = vand.u32 %v753, 4294901760
      %v755 = vsub.f32 %v753, %v754
      %v756 = vand.u32 %v755, 4294901760
      %757 = vmatprep.subr.mxu0 %v756
      %v758 = vand.u32 %v374, 4294901760
      %v759 = vsub.f32 %v374, %v758
      %v760 = vand.u32 %v759, 4294901760
      %v761 = vsub.f32 %v759, %v760
      %v762 = vand.u32 %v761, 4294901760
      %763 = vmatpush2.msra.mxu0 %v762
      %v764 = vand.u32 %v373, 4294901760
      %v765 = vsub.f32 %v373, %v764
      %v766 = vand.u32 %v765, 4294901760
      %v767 = vsub.f32 %v765, %v766
      %v768 = vand.u32 %v767, 4294901760
      %769 = vmatprep.subr.mxu0 %v768
      %v770 = vand.u32 %v372, 4294901760
      %v771 = vsub.f32 %v372, %v770
      %v772 = vand.u32 %v771, 4294901760
      %v773 = vsub.f32 %v771, %v772
      %v774 = vand.u32 %v773, 4294901760
      %775 = vmatpush2.msra.mxu0 %v774
      %v776 = vand.u32 %v371, 4294901760
      %v777 = vsub.f32 %v371, %v776
      %v778 = vand.u32 %v777, 4294901760
      %v779 = vsub.f32 %v777, %v778
      %v780 = vand.u32 %v779, 4294901760
      %781 = vmatprep.subr.mxu0 %v780
      %v782 = vand.u32 %v370, 4294901760
      %v783 = vsub.f32 %v370, %v782
      %v784 = vand.u32 %v783, 4294901760
      %v785 = vsub.f32 %v783, %v784
      %v786 = vand.u32 %v785, 4294901760
      %787 = vmatpush2.msra.mxu0 %v786
      %v788 = vand.u32 %v369, 4294901760
      %v789 = vsub.f32 %v369, %v788
      %v790 = vand.u32 %v789, 4294901760
      %v791 = vsub.f32 %v789, %v790
      %v792 = vand.u32 %v791, 4294901760
      %793 = vmatprep.subr.mxu0 %v792
      %v794 = vand.u32 %v368, 4294901760
      %v795 = vsub.f32 %v368, %v794
      %v796 = vand.u32 %v795, 4294901760
      %v797 = vsub.f32 %v795, %v796
      %v798 = vand.u32 %v797, 4294901760
      %799 = vmatpush2.msra.mxu0 %v798
      %v800 = vand.u32 %v367, 4294901760
      %v801 = vsub.f32 %v367, %v800
      %v802 = vand.u32 %v801, 4294901760
      %v803 = vsub.f32 %v801, %v802
      %v804 = vand.u32 %v803, 4294901760
      %805 = vmatprep.subr.mxu0 %v804
      %v806 = vand.u32 %v366, 4294901760
      %v807 = vsub.f32 %v366, %v806
      %v808 = vand.u32 %v807, 4294901760
      %v809 = vsub.f32 %v807, %v808
      %v810 = vand.u32 %v809, 4294901760
      %811 = vmatpush2.msra.mxu0 %v810
      %v812 = vand.u32 %v365, 4294901760
      %v813 = vsub.f32 %v365, %v812
      %v814 = vand.u32 %v813, 4294901760
      %v815 = vsub.f32 %v813, %v814
      %v816 = vand.u32 %v815, 4294901760
      %817 = vmatprep.subr.mxu0 %v816
      %v818 = vand.u32 %v364, 4294901760
      %v819 = vsub.f32 %v364, %v818
      %v820 = vand.u32 %v819, 4294901760
      %v821 = vsub.f32 %v819, %v820
      %v822 = vand.u32 %v821, 4294901760
      %823 = vmatpush2.msra.mxu0 %v822
      %v824 = vand.u32 %v363, 4294901760
      %v825 = vsub.f32 %v363, %v824
      %v826 = vand.u32 %v825, 4294901760
      %v827 = vsub.f32 %v825, %v826
      %v828 = vand.u32 %v827, 4294901760
      %829 = vmatprep.subr.mxu0 %v828
      %v830 = vand.u32 %v362, 4294901760
      %v831 = vsub.f32 %v362, %v830
      %v832 = vand.u32 %v831, 4294901760
      %v833 = vsub.f32 %v831, %v832
      %v834 = vand.u32 %v833, 4294901760
      %835 = vmatpush2.msra.mxu0 %v834
      %v836 = vand.u32 %v361, 4294901760
      %v837 = vsub.f32 %v361, %v836
      %v838 = vand.u32 %v837, 4294901760
      %v839 = vsub.f32 %v837, %v838
      %v840 = vand.u32 %v839, 4294901760
      %841 = vmatprep.subr.mxu0 %v840
      %v842 = vand.u32 %v360, 4294901760
      %v843 = vsub.f32 %v360, %v842
      %v844 = vand.u32 %v843, 4294901760
      %v845 = vsub.f32 %v843, %v844
      %v846 = vand.u32 %v845, 4294901760
      %847 = vmatpush2.msra.mxu0 %v846
      %v848 = vand.u32 %v359, 4294901760
      %v849 = vsub.f32 %v359, %v848
      %v850 = vand.u32 %v849, 4294901760
      %v851 = vsub.f32 %v849, %v850
      %v852 = vand.u32 %v851, 4294901760
      %853 = vmatprep.subr.mxu0 %v852
      %v854 = vand.u32 %v358, 4294901760
      %v855 = vsub.f32 %v358, %v854
      %v856 = vand.u32 %v855, 4294901760
      %v857 = vsub.f32 %v855, %v856
      %v858 = vand.u32 %v857, 4294901760
      %859 = vmatpush2.msra.mxu0 %v858
      %v860 = vand.u32 %v357, 4294901760
      %v861 = vsub.f32 %v357, %v860
      %v862 = vand.u32 %v861, 4294901760
      %v863 = vsub.f32 %v861, %v862
      %v864 = vand.u32 %v863, 4294901760
      %865 = vmatprep.subr.mxu0 %v864
      %v866 = vand.u32 %v356, 4294901760
      %v867 = vsub.f32 %v356, %v866
      %v868 = vand.u32 %v867, 4294901760
      %v869 = vsub.f32 %v867, %v868
      %v870 = vand.u32 %v869, 4294901760
      %871 = vmatpush2.msra.mxu0 %v870
      %v872 = vand.u32 %v355, 4294901760
      %v873 = vsub.f32 %v355, %v872
      %v874 = vand.u32 %v873, 4294901760
      %v875 = vsub.f32 %v873, %v874
      %v876 = vand.u32 %v875, 4294901760
      %877 = vmatprep.subr.mxu0 %v876
      %v878 = vand.u32 %v354, 4294901760
      %v879 = vsub.f32 %v354, %v878
      %v880 = vand.u32 %v879, 4294901760
      %v881 = vsub.f32 %v879, %v880
      %v882 = vand.u32 %v881, 4294901760
      %883 = vmatpush2.msra.mxu0 %v882
      %v884 = vand.u32 %v353, 4294901760
      %v885 = vsub.f32 %v353, %v884
      %v886 = vand.u32 %v885, 4294901760
      %v887 = vsub.f32 %v885, %v886
      %v888 = vand.u32 %v887, 4294901760
      %889 = vmatprep.subr.mxu0 %v888
      %v890 = vand.u32 %v352, 4294901760
      %v891 = vsub.f32 %v352, %v890
      %v892 = vand.u32 %v891, 4294901760
      %v893 = vsub.f32 %v891, %v892
      %v894 = vand.u32 %v893, 4294901760
      %895 = vmatpush2.msra.mxu0 %v894
      %v896 = vand.u32 %v351, 4294901760
      %v897 = vsub.f32 %v351, %v896
      %v898 = vand.u32 %v897, 4294901760
      %v899 = vsub.f32 %v897, %v898
      %v900 = vand.u32 %v899, 4294901760
      %901 = vmatprep.subr.mxu0 %v900
      %v902 = vand.u32 %v350, 4294901760
      %v903 = vsub.f32 %v350, %v902
      %v904 = vand.u32 %v903, 4294901760
      %v905 = vsub.f32 %v903, %v904
      %v906 = vand.u32 %v905, 4294901760
      %907 = vmatpush2.msra.mxu0 %v906
      %v908 = vand.u32 %v349, 4294901760
      %v909 = vsub.f32 %v349, %v908
      %v910 = vand.u32 %v909, 4294901760
      %v911 = vsub.f32 %v909, %v910
      %v912 = vand.u32 %v911, 4294901760
      %913 = vmatprep.subr.mxu0 %v912
      %v914 = vand.u32 %v348, 4294901760
      %v915 = vsub.f32 %v348, %v914
      %v916 = vand.u32 %v915, 4294901760
      %v917 = vsub.f32 %v915, %v916
      %v918 = vand.u32 %v917, 4294901760
      %919 = vmatpush2.msra.mxu0 %v918
      %v920 = vand.u32 %v388, 4294901760
      %921 = vmatprep.mubr.f32.mxu0 %v920
      %v922 = vand.u32 %v387, 4294901760
      %923 = vmatmul.mubr.f32.gmra.mxu0 %v922
      %v924 = vpop.f32.mrf.mxu0
      %v925 = vadd.f32 %v532, %v924
      %v926 = vpop.f32.mrf.mxu0
      %v927 = vadd.f32 %v534, %v926
      %928 = vdwg.mxu0
      %v929 = vand.u32 %v347, 4294901760
      %v930 = vsub.f32 %v347, %v929
      %931 = vmatprep.subr.mxu0 %v930
      %v932 = vand.u32 %v346, 4294901760
      %v933 = vsub.f32 %v346, %v932
      %934 = vmatpush1.msra.mxu0 %v933
      %v935 = vand.u32 %v345, 4294901760
      %v936 = vsub.f32 %v345, %v935
      %937 = vmatprep.subr.mxu0 %v936
      %v938 = vand.u32 %v344, 4294901760
      %v939 = vsub.f32 %v344, %v938
      %940 = vmatpush1.msra.mxu0 %v939
      %v941 = vand.u32 %v343, 4294901760
      %v942 = vsub.f32 %v343, %v941
      %943 = vmatprep.subr.mxu0 %v942
      %v944 = vand.u32 %v342, 4294901760
      %v945 = vsub.f32 %v342, %v944
      %946 = vmatpush1.msra.mxu0 %v945
      %v947 = vand.u32 %v341, 4294901760
      %v948 = vsub.f32 %v341, %v947
      %949 = vmatprep.subr.mxu0 %v948
      %v950 = vand.u32 %v340, 4294901760
      %v951 = vsub.f32 %v340, %v950
      %952 = vmatpush1.msra.mxu0 %v951
      %v953 = vand.u32 %v339, 4294901760
      %v954 = vsub.f32 %v339, %v953
      %955 = vmatprep.subr.mxu0 %v954
      %v956 = vand.u32 %v338, 4294901760
      %v957 = vsub.f32 %v338, %v956
      %958 = vmatpush1.msra.mxu0 %v957
      %v959 = vand.u32 %v337, 4294901760
      %v960 = vsub.f32 %v337, %v959
      %961 = vmatprep.subr.mxu0 %v960
      %v962 = vand.u32 %v336, 4294901760
      %v963 = vsub.f32 %v336, %v962
      %964 = vmatpush1.msra.mxu0 %v963
      %v965 = vand.u32 %v335, 4294901760
      %v966 = vsub.f32 %v335, %v965
      %967 = vmatprep.subr.mxu0 %v966
      %v968 = vand.u32 %v334, 4294901760
      %v969 = vsub.f32 %v334, %v968
      %970 = vmatpush1.msra.mxu0 %v969
      %v971 = vand.u32 %v333, 4294901760
      %v972 = vsub.f32 %v333, %v971
      %973 = vmatprep.subr.mxu0 %v972
      %v974 = vand.u32 %v332, 4294901760
      %v975 = vsub.f32 %v332, %v974
      %976 = vmatpush1.msra.mxu0 %v975
      %v977 = vand.u32 %v331, 4294901760
      %v978 = vsub.f32 %v331, %v977
      %979 = vmatprep.subr.mxu0 %v978
      %v980 = vand.u32 %v330, 4294901760
      %v981 = vsub.f32 %v330, %v980
      %982 = vmatpush1.msra.mxu0 %v981
      %v983 = vand.u32 %v329, 4294901760
      %v984 = vsub.f32 %v329, %v983
      %985 = vmatprep.subr.mxu0 %v984
      %v986 = vand.u32 %v328, 4294901760
      %v987 = vsub.f32 %v328, %v986
      %988 = vmatpush1.msra.mxu0 %v987
      %v989 = vand.u32 %v327, 4294901760
      %v990 = vsub.f32 %v327, %v989
      %991 = vmatprep.subr.mxu0 %v990
      %v992 = vand.u32 %v326, 4294901760
      %v993 = vsub.f32 %v326, %v992
      %994 = vmatpush1.msra.mxu0 %v993
      %v995 = vand.u32 %v325, 4294901760
      %v996 = vsub.f32 %v325, %v995
      %997 = vmatprep.subr.mxu0 %v996
      %v998 = vand.u32 %v324, 4294901760
      %v999 = vsub.f32 %v324, %v998
      %1000 = vmatpush1.msra.mxu0 %v999
      %v1001 = vand.u32 %v323, 4294901760
      %v1002 = vsub.f32 %v323, %v1001
      %1003 = vmatprep.subr.mxu0 %v1002
      %v1004 = vand.u32 %v322, 4294901760
      %v1005 = vsub.f32 %v322, %v1004
      %1006 = vmatpush1.msra.mxu0 %v1005
      %v1007 = vand.u32 %v321, 4294901760
      %v1008 = vsub.f32 %v321, %v1007
      %1009 = vmatprep.subr.mxu0 %v1008
      %v1010 = vand.u32 %v320, 4294901760
      %v1011 = vsub.f32 %v320, %v1010
      %1012 = vmatpush1.msra.mxu0 %v1011
      %v1013 = vand.u32 %v319, 4294901760
      %v1014 = vsub.f32 %v319, %v1013
      %1015 = vmatprep.subr.mxu0 %v1014
      %v1016 = vand.u32 %v318, 4294901760
      %v1017 = vsub.f32 %v318, %v1016
      %1018 = vmatpush1.msra.mxu0 %v1017
      %v1019 = vand.u32 %v317, 4294901760
      %v1020 = vsub.f32 %v317, %v1019
      %1021 = vmatprep.subr.mxu0 %v1020
      %v1022 = vand.u32 %v316, 4294901760
      %v1023 = vsub.f32 %v316, %v1022
      %1024 = vmatpush1.msra.mxu0 %v1023
      %v1025 = vand.u32 %v379, 4294901760
      %v1026 = vsub.f32 %v379, %v1025
      %1027 = vmatprep.subr.mxu0 %v1026
      %v1028 = vand.u32 %v378, 4294901760
      %v1029 = vsub.f32 %v378, %v1028
      %1030 = vmatpush2.msra.mxu0 %v1029
      %v1031 = vand.u32 %v377, 4294901760
      %v1032 = vsub.f32 %v377, %v1031
      %1033 = vmatprep.subr.mxu0 %v1032
      %v1034 = vand.u32 %v376, 4294901760
      %v1035 = vsub.f32 %v376, %v1034
      %1036 = vmatpush2.msra.mxu0 %v1035
      %v1037 = vand.u32 %v375, 4294901760
      %v1038 = vsub.f32 %v375, %v1037
      %1039 = vmatprep.subr.mxu0 %v1038
      %v1040 = vand.u32 %v374, 4294901760
      %v1041 = vsub.f32 %v374, %v1040
      %1042 = vmatpush2.msra.mxu0 %v1041
      %v1043 = vand.u32 %v373, 4294901760
      %v1044 = vsub.f32 %v373, %v1043
      %1045 = vmatprep.subr.mxu0 %v1044
      %v1046 = vand.u32 %v372, 4294901760
      %v1047 = vsub.f32 %v372, %v1046
      %1048 = vmatpush2.msra.mxu0 %v1047
      %v1049 = vand.u32 %v371, 4294901760
      %v1050 = vsub.f32 %v371, %v1049
      %1051 = vmatprep.subr.mxu0 %v1050
      %v1052 = vand.u32 %v370, 4294901760
      %v1053 = vsub.f32 %v370, %v1052
      %1054 = vmatpush2.msra.mxu0 %v1053
      %v1055 = vand.u32 %v369, 4294901760
      %v1056 = vsub.f32 %v369, %v1055
      %1057 = vmatprep.subr.mxu0 %v1056
      %v1058 = vand.u32 %v368, 4294901760
      %v1059 = vsub.f32 %v368, %v1058
      %1060 = vmatpush2.msra.mxu0 %v1059
      %v1061 = vand.u32 %v367, 4294901760
      %v1062 = vsub.f32 %v367, %v1061
      %1063 = vmatprep.subr.mxu0 %v1062
      %v1064 = vand.u32 %v366, 4294901760
      %v1065 = vsub.f32 %v366, %v1064
      %1066 = vmatpush2.msra.mxu0 %v1065
      %v1067 = vand.u32 %v365, 4294901760
      %v1068 = vsub.f32 %v365, %v1067
      %1069 = vmatprep.subr.mxu0 %v1068
      %v1070 = vand.u32 %v364, 4294901760
      %v1071 = vsub.f32 %v364, %v1070
      %1072 = vmatpush2.msra.mxu0 %v1071
      %v1073 = vand.u32 %v363, 4294901760
      %v1074 = vsub.f32 %v363, %v1073
      %1075 = vmatprep.subr.mxu0 %v1074
      %v1076 = vand.u32 %v362, 4294901760
      %v1077 = vsub.f32 %v362, %v1076
      %1078 = vmatpush2.msra.mxu0 %v1077
      %v1079 = vand.u32 %v361, 4294901760
      %v1080 = vsub.f32 %v361, %v1079
      %1081 = vmatprep.subr.mxu0 %v1080
      %v1082 = vand.u32 %v360, 4294901760
      %v1083 = vsub.f32 %v360, %v1082
      %1084 = vmatpush2.msra.mxu0 %v1083
      %v1085 = vand.u32 %v359, 4294901760
      %v1086 = vsub.f32 %v359, %v1085
      %1087 = vmatprep.subr.mxu0 %v1086
      %v1088 = vand.u32 %v358, 4294901760
      %v1089 = vsub.f32 %v358, %v1088
      %1090 = vmatpush2.msra.mxu0 %v1089
      %v1091 = vand.u32 %v357, 4294901760
      %v1092 = vsub.f32 %v357, %v1091
      %1093 = vmatprep.subr.mxu0 %v1092
      %v1094 = vand.u32 %v356, 4294901760
      %v1095 = vsub.f32 %v356, %v1094
      %1096 = vmatpush2.msra.mxu0 %v1095
      %v1097 = vand.u32 %v355, 4294901760
      %v1098 = vsub.f32 %v355, %v1097
      %1099 = vmatprep.subr.mxu0 %v1098
      %v1100 = vand.u32 %v354, 4294901760
      %v1101 = vsub.f32 %v354, %v1100
      %1102 = vmatpush2.msra.mxu0 %v1101
      %v1103 = vand.u32 %v353, 4294901760
      %v1104 = vsub.f32 %v353, %v1103
      %1105 = vmatprep.subr.mxu0 %v1104
      %v1106 = vand.u32 %v352, 4294901760
      %v1107 = vsub.f32 %v352, %v1106
      %1108 = vmatpush2.msra.mxu0 %v1107
      %v1109 = vand.u32 %v351, 4294901760
      %v1110 = vsub.f32 %v351, %v1109
      %1111 = vmatprep.subr.mxu0 %v1110
      %v1112 = vand.u32 %v350, 4294901760
      %v1113 = vsub.f32 %v350, %v1112
      %1114 = vmatpush2.msra.mxu0 %v1113
      %v1115 = vand.u32 %v349, 4294901760
      %v1116 = vsub.f32 %v349, %v1115
      %1117 = vmatprep.subr.mxu0 %v1116
      %v1118 = vand.u32 %v348, 4294901760
      %v1119 = vsub.f32 %v348, %v1118
      %1120 = vmatpush2.msra.mxu0 %v1119
      %v1121 = vand.u32 %v388, 4294901760
      %v1122 = vsub.f32 %v388, %v1121
      %1123 = vmatprep.mubr.f32.mxu0 %v1122
      %v1124 = vand.u32 %v387, 4294901760
      %v1125 = vsub.f32 %v387, %v1124
      %1126 = vmatmul.mubr.f32.gmra.mxu0 %v1125
      %v1127 = vpop.f32.mrf.mxu0
      %v1128 = vadd.f32 %v925, %v1127
      %v1129 = vpop.f32.mrf.mxu0
      %v1130 = vadd.f32 %v927, %v1129
      %1131 = vdwg.mxu0
      %v1132 = vand.u32 %v347, 4294901760
      %1133 = vmatprep.subr.mxu0 %v1132
      %v1134 = vand.u32 %v346, 4294901760
      %1135 = vmatpush1.msra.mxu0 %v1134
      %v1136 = vand.u32 %v345, 4294901760
      %1137 = vmatprep.subr.mxu0 %v1136
      %v1138 = vand.u32 %v344, 4294901760
      %1139 = vmatpush1.msra.mxu0 %v1138
      %v1140 = vand.u32 %v343, 4294901760
      %1141 = vmatprep.subr.mxu0 %v1140
      %v1142 = vand.u32 %v342, 4294901760
      %1143 = vmatpush1.msra.mxu0 %v1142
      %v1144 = vand.u32 %v341, 4294901760
      %1145 = vmatprep.subr.mxu0 %v1144
      %v1146 = vand.u32 %v340, 4294901760
      %1147 = vmatpush1.msra.mxu0 %v1146
      %v1148 = vand.u32 %v339, 4294901760
      %1149 = vmatprep.subr.mxu0 %v1148
      %v1150 = vand.u32 %v338, 4294901760
      %1151 = vmatpush1.msra.mxu0 %v1150
      %v1152 = vand.u32 %v337, 4294901760
      %1153 = vmatprep.subr.mxu0 %v1152
      %v1154 = vand.u32 %v336, 4294901760
      %1155 = vmatpush1.msra.mxu0 %v1154
      %v1156 = vand.u32 %v335, 4294901760
      %1157 = vmatprep.subr.mxu0 %v1156
      %v1158 = vand.u32 %v334, 4294901760
      %1159 = vmatpush1.msra.mxu0 %v1158
      %v1160 = vand.u32 %v333, 4294901760
      %1161 = vmatprep.subr.mxu0 %v1160
      %v1162 = vand.u32 %v332, 4294901760
      %1163 = vmatpush1.msra.mxu0 %v1162
      %v1164 = vand.u32 %v331, 4294901760
      %1165 = vmatprep.subr.mxu0 %v1164
      %v1166 = vand.u32 %v330, 4294901760
      %1167 = vmatpush1.msra.mxu0 %v1166
      %v1168 = vand.u32 %v329, 4294901760
      %1169 = vmatprep.subr.mxu0 %v1168
      %v1170 = vand.u32 %v328, 4294901760
      %1171 = vmatpush1.msra.mxu0 %v1170
      %v1172 = vand.u32 %v327, 4294901760
      %1173 = vmatprep.subr.mxu0 %v1172
      %v1174 = vand.u32 %v326, 4294901760
      %1175 = vmatpush1.msra.mxu0 %v1174
      %v1176 = vand.u32 %v325, 4294901760
      %1177 = vmatprep.subr.mxu0 %v1176
      %v1178 = vand.u32 %v324, 4294901760
      %1179 = vmatpush1.msra.mxu0 %v1178
      %v1180 = vand.u32 %v323, 4294901760
      %1181 = vmatprep.subr.mxu0 %v1180
      %v1182 = vand.u32 %v322, 4294901760
      %1183 = vmatpush1.msra.mxu0 %v1182
      %v1184 = vand.u32 %v321, 4294901760
      %1185 = vmatprep.subr.mxu0 %v1184
      %v1186 = vand.u32 %v320, 4294901760
      %1187 = vmatpush1.msra.mxu0 %v1186
      %v1188 = vand.u32 %v319, 4294901760
      %1189 = vmatprep.subr.mxu0 %v1188
      %v1190 = vand.u32 %v318, 4294901760
      %1191 = vmatpush1.msra.mxu0 %v1190
      %v1192 = vand.u32 %v317, 4294901760
      %1193 = vmatprep.subr.mxu0 %v1192
      %v1194 = vand.u32 %v316, 4294901760
      %1195 = vmatpush1.msra.mxu0 %v1194
      %v1196 = vand.u32 %v379, 4294901760
      %1197 = vmatprep.subr.mxu0 %v1196
      %v1198 = vand.u32 %v378, 4294901760
      %1199 = vmatpush2.msra.mxu0 %v1198
      %v1200 = vand.u32 %v377, 4294901760
      %1201 = vmatprep.subr.mxu0 %v1200
      %v1202 = vand.u32 %v376, 4294901760
      %1203 = vmatpush2.msra.mxu0 %v1202
      %v1204 = vand.u32 %v375, 4294901760
      %1205 = vmatprep.subr.mxu0 %v1204
      %v1206 = vand.u32 %v374, 4294901760
      %1207 = vmatpush2.msra.mxu0 %v1206
      %v1208 = vand.u32 %v373, 4294901760
      %1209 = vmatprep.subr.mxu0 %v1208
      %v1210 = vand.u32 %v372, 4294901760
      %1211 = vmatpush2.msra.mxu0 %v1210
      %v1212 = vand.u32 %v371, 4294901760
      %1213 = vmatprep.subr.mxu0 %v1212
      %v1214 = vand.u32 %v370, 4294901760
      %1215 = vmatpush2.msra.mxu0 %v1214
      %v1216 = vand.u32 %v369, 4294901760
      %1217 = vmatprep.subr.mxu0 %v1216
      %v1218 = vand.u32 %v368, 4294901760
      %1219 = vmatpush2.msra.mxu0 %v1218
      %v1220 = vand.u32 %v367, 4294901760
      %1221 = vmatprep.subr.mxu0 %v1220
      %v1222 = vand.u32 %v366, 4294901760
      %1223 = vmatpush2.msra.mxu0 %v1222
      %v1224 = vand.u32 %v365, 4294901760
      %1225 = vmatprep.subr.mxu0 %v1224
      %v1226 = vand.u32 %v364, 4294901760
      %1227 = vmatpush2.msra.mxu0 %v1226
      %v1228 = vand.u32 %v363, 4294901760
      %1229 = vmatprep.subr.mxu0 %v1228
      %v1230 = vand.u32 %v362, 4294901760
      %1231 = vmatpush2.msra.mxu0 %v1230
      %v1232 = vand.u32 %v361, 4294901760
      %1233 = vmatprep.subr.mxu0 %v1232
      %v1234 = vand.u32 %v360, 4294901760
      %1235 = vmatpush2.msra.mxu0 %v1234
      %v1236 = vand.u32 %v359, 4294901760
      %1237 = vmatprep.subr.mxu0 %v1236
      %v1238 = vand.u32 %v358, 4294901760
      %1239 = vmatpush2.msra.mxu0 %v1238
      %v1240 = vand.u32 %v357, 4294901760
      %1241 = vmatprep.subr.mxu0 %v1240
      %v1242 = vand.u32 %v356, 4294901760
      %1243 = vmatpush2.msra.mxu0 %v1242
      %v1244 = vand.u32 %v355, 4294901760
      %1245 = vmatprep.subr.mxu0 %v1244
      %v1246 = vand.u32 %v354, 4294901760
      %1247 = vmatpush2.msra.mxu0 %v1246
      %v1248 = vand.u32 %v353, 4294901760
      %1249 = vmatprep.subr.mxu0 %v1248
      %v1250 = vand.u32 %v352, 4294901760
      %1251 = vmatpush2.msra.mxu0 %v1250
      %v1252 = vand.u32 %v351, 4294901760
      %1253 = vmatprep.subr.mxu0 %v1252
      %v1254 = vand.u32 %v350, 4294901760
      %1255 = vmatpush2.msra.mxu0 %v1254
      %v1256 = vand.u32 %v349, 4294901760
      %1257 = vmatprep.subr.mxu0 %v1256
      %v1258 = vand.u32 %v348, 4294901760
      %1259 = vmatpush2.msra.mxu0 %v1258
      %v1260 = vand.u32 %v388, 4294901760
      %v1261 = vsub.f32 %v388, %v1260
      %v1262 = vand.u32 %v1261, 4294901760
      %1263 = vmatprep.mubr.f32.mxu0 %v1262
      %v1264 = vand.u32 %v387, 4294901760
      %v1265 = vsub.f32 %v387, %v1264
      %v1266 = vand.u32 %v1265, 4294901760
      %1267 = vmatmul.mubr.f32.gmra.mxu0 %v1266
      %v1268 = vpop.f32.mrf.mxu0
      %v1269 = vadd.f32 %v1128, %v1268
      %v1270 = vpop.f32.mrf.mxu0
      %v1271 = vadd.f32 %v1130, %v1270
      %1272 = vdwg.mxu0
      %v1273 = vand.u32 %v347, 4294901760
      %v1274 = vsub.f32 %v347, %v1273
      %v1275 = vand.u32 %v1274, 4294901760
      %1276 = vmatprep.subr.mxu0 %v1275
      %v1277 = vand.u32 %v346, 4294901760
      %v1278 = vsub.f32 %v346, %v1277
      %v1279 = vand.u32 %v1278, 4294901760
      %1280 = vmatpush1.msra.mxu0 %v1279
      %v1281 = vand.u32 %v345, 4294901760
      %v1282 = vsub.f32 %v345, %v1281
      %v1283 = vand.u32 %v1282, 4294901760
      %1284 = vmatprep.subr.mxu0 %v1283
      %v1285 = vand.u32 %v344, 4294901760
      %v1286 = vsub.f32 %v344, %v1285
      %v1287 = vand.u32 %v1286, 4294901760
      %1288 = vmatpush1.msra.mxu0 %v1287
      %v1289 = vand.u32 %v343, 4294901760
      %v1290 = vsub.f32 %v343, %v1289
      %v1291 = vand.u32 %v1290, 4294901760
      %1292 = vmatprep.subr.mxu0 %v1291
      %v1293 = vand.u32 %v342, 4294901760
      %v1294 = vsub.f32 %v342, %v1293
      %v1295 = vand.u32 %v1294, 4294901760
      %1296 = vmatpush1.msra.mxu0 %v1295
      %v1297 = vand.u32 %v341, 4294901760
      %v1298 = vsub.f32 %v341, %v1297
      %v1299 = vand.u32 %v1298, 4294901760
      %1300 = vmatprep.subr.mxu0 %v1299
      %v1301 = vand.u32 %v340, 4294901760
      %v1302 = vsub.f32 %v340, %v1301
      %v1303 = vand.u32 %v1302, 4294901760
      %1304 = vmatpush1.msra.mxu0 %v1303
      %v1305 = vand.u32 %v339, 4294901760
      %v1306 = vsub.f32 %v339, %v1305
      %v1307 = vand.u32 %v1306, 4294901760
      %1308 = vmatprep.subr.mxu0 %v1307
      %v1309 = vand.u32 %v338, 4294901760
      %v1310 = vsub.f32 %v338, %v1309
      %v1311 = vand.u32 %v1310, 4294901760
      %1312 = vmatpush1.msra.mxu0 %v1311
      %v1313 = vand.u32 %v337, 4294901760
      %v1314 = vsub.f32 %v337, %v1313
      %v1315 = vand.u32 %v1314, 4294901760
      %1316 = vmatprep.subr.mxu0 %v1315
      %v1317 = vand.u32 %v336, 4294901760
      %v1318 = vsub.f32 %v336, %v1317
      %v1319 = vand.u32 %v1318, 4294901760
      %1320 = vmatpush1.msra.mxu0 %v1319
      %v1321 = vand.u32 %v335, 4294901760
      %v1322 = vsub.f32 %v335, %v1321
      %v1323 = vand.u32 %v1322, 4294901760
      %1324 = vmatprep.subr.mxu0 %v1323
      %v1325 = vand.u32 %v334, 4294901760
      %v1326 = vsub.f32 %v334, %v1325
      %v1327 = vand.u32 %v1326, 4294901760
      %1328 = vmatpush1.msra.mxu0 %v1327
      %v1329 = vand.u32 %v333, 4294901760
      %v1330 = vsub.f32 %v333, %v1329
      %v1331 = vand.u32 %v1330, 4294901760
      %1332 = vmatprep.subr.mxu0 %v1331
      %v1333 = vand.u32 %v332, 4294901760
      %v1334 = vsub.f32 %v332, %v1333
      %v1335 = vand.u32 %v1334, 4294901760
      %1336 = vmatpush1.msra.mxu0 %v1335
      %v1337 = vand.u32 %v331, 4294901760
      %v1338 = vsub.f32 %v331, %v1337
      %v1339 = vand.u32 %v1338, 4294901760
      %1340 = vmatprep.subr.mxu0 %v1339
      %v1341 = vand.u32 %v330, 4294901760
      %v1342 = vsub.f32 %v330, %v1341
      %v1343 = vand.u32 %v1342, 4294901760
      %1344 = vmatpush1.msra.mxu0 %v1343
      %v1345 = vand.u32 %v329, 4294901760
      %v1346 = vsub.f32 %v329, %v1345
      %v1347 = vand.u32 %v1346, 4294901760
      %1348 = vmatprep.subr.mxu0 %v1347
      %v1349 = vand.u32 %v328, 4294901760
      %v1350 = vsub.f32 %v328, %v1349
      %v1351 = vand.u32 %v1350, 4294901760
      %1352 = vmatpush1.msra.mxu0 %v1351
      %v1353 = vand.u32 %v327, 4294901760
      %v1354 = vsub.f32 %v327, %v1353
      %v1355 = vand.u32 %v1354, 4294901760
      %1356 = vmatprep.subr.mxu0 %v1355
      %v1357 = vand.u32 %v326, 4294901760
      %v1358 = vsub.f32 %v326, %v1357
      %v1359 = vand.u32 %v1358, 4294901760
      %1360 = vmatpush1.msra.mxu0 %v1359
      %v1361 = vand.u32 %v325, 4294901760
      %v1362 = vsub.f32 %v325, %v1361
      %v1363 = vand.u32 %v1362, 4294901760
      %1364 = vmatprep.subr.mxu0 %v1363
      %v1365 = vand.u32 %v324, 4294901760
      %v1366 = vsub.f32 %v324, %v1365
      %v1367 = vand.u32 %v1366, 4294901760
      %1368 = vmatpush1.msra.mxu0 %v1367
      %v1369 = vand.u32 %v323, 4294901760
      %v1370 = vsub.f32 %v323, %v1369
      %v1371 = vand.u32 %v1370, 4294901760
      %1372 = vmatprep.subr.mxu0 %v1371
      %v1373 = vand.u32 %v322, 4294901760
      %v1374 = vsub.f32 %v322, %v1373
      %v1375 = vand.u32 %v1374, 4294901760
      %1376 = vmatpush1.msra.mxu0 %v1375
      %v1377 = vand.u32 %v321, 4294901760
      %v1378 = vsub.f32 %v321, %v1377
      %v1379 = vand.u32 %v1378, 4294901760
      %1380 = vmatprep.subr.mxu0 %v1379
      %v1381 = vand.u32 %v320, 4294901760
      %v1382 = vsub.f32 %v320, %v1381
      %v1383 = vand.u32 %v1382, 4294901760
      %1384 = vmatpush1.msra.mxu0 %v1383
      %v1385 = vand.u32 %v319, 4294901760
      %v1386 = vsub.f32 %v319, %v1385
      %v1387 = vand.u32 %v1386, 4294901760
      %1388 = vmatprep.subr.mxu0 %v1387
      %v1389 = vand.u32 %v318, 4294901760
      %v1390 = vsub.f32 %v318, %v1389
      %v1391 = vand.u32 %v1390, 4294901760
      %1392 = vmatpush1.msra.mxu0 %v1391
      %v1393 = vand.u32 %v317, 4294901760
      %v1394 = vsub.f32 %v317, %v1393
      %v1395 = vand.u32 %v1394, 4294901760
      %1396 = vmatprep.subr.mxu0 %v1395
      %v1397 = vand.u32 %v316, 4294901760
      %v1398 = vsub.f32 %v316, %v1397
      %v1399 = vand.u32 %v1398, 4294901760
      %1400 = vmatpush1.msra.mxu0 %v1399
      %v1401 = vand.u32 %v379, 4294901760
      %v1402 = vsub.f32 %v379, %v1401
      %v1403 = vand.u32 %v1402, 4294901760
      %1404 = vmatprep.subr.mxu0 %v1403
      %v1405 = vand.u32 %v378, 4294901760
      %v1406 = vsub.f32 %v378, %v1405
      %v1407 = vand.u32 %v1406, 4294901760
      %1408 = vmatpush2.msra.mxu0 %v1407
      %v1409 = vand.u32 %v377, 4294901760
      %v1410 = vsub.f32 %v377, %v1409
      %v1411 = vand.u32 %v1410, 4294901760
      %1412 = vmatprep.subr.mxu0 %v1411
      %v1413 = vand.u32 %v376, 4294901760
      %v1414 = vsub.f32 %v376, %v1413
      %v1415 = vand.u32 %v1414, 4294901760
      %1416 = vmatpush2.msra.mxu0 %v1415
      %v1417 = vand.u32 %v375, 4294901760
      %v1418 = vsub.f32 %v375, %v1417
      %v1419 = vand.u32 %v1418, 4294901760
      %1420 = vmatprep.subr.mxu0 %v1419
      %v1421 = vand.u32 %v374, 4294901760
      %v1422 = vsub.f32 %v374, %v1421
      %v1423 = vand.u32 %v1422, 4294901760
      %1424 = vmatpush2.msra.mxu0 %v1423
      %v1425 = vand.u32 %v373, 4294901760
      %v1426 = vsub.f32 %v373, %v1425
      %v1427 = vand.u32 %v1426, 4294901760
      %1428 = vmatprep.subr.mxu0 %v1427
      %v1429 = vand.u32 %v372, 4294901760
      %v1430 = vsub.f32 %v372, %v1429
      %v1431 = vand.u32 %v1430, 4294901760
      %1432 = vmatpush2.msra.mxu0 %v1431
      %v1433 = vand.u32 %v371, 4294901760
      %v1434 = vsub.f32 %v371, %v1433
      %v1435 = vand.u32 %v1434, 4294901760
      %1436 = vmatprep.subr.mxu0 %v1435
      %v1437 = vand.u32 %v370, 4294901760
      %v1438 = vsub.f32 %v370, %v1437
      %v1439 = vand.u32 %v1438, 4294901760
      %1440 = vmatpush2.msra.mxu0 %v1439
      %v1441 = vand.u32 %v369, 4294901760
      %v1442 = vsub.f32 %v369, %v1441
      %v1443 = vand.u32 %v1442, 4294901760
      %1444 = vmatprep.subr.mxu0 %v1443
      %v1445 = vand.u32 %v368, 4294901760
      %v1446 = vsub.f32 %v368, %v1445
      %v1447 = vand.u32 %v1446, 4294901760
      %1448 = vmatpush2.msra.mxu0 %v1447
      %v1449 = vand.u32 %v367, 4294901760
      %v1450 = vsub.f32 %v367, %v1449
      %v1451 = vand.u32 %v1450, 4294901760
      %1452 = vmatprep.subr.mxu0 %v1451
      %v1453 = vand.u32 %v366, 4294901760
      %v1454 = vsub.f32 %v366, %v1453
      %v1455 = vand.u32 %v1454, 4294901760
      %1456 = vmatpush2.msra.mxu0 %v1455
      %v1457 = vand.u32 %v365, 4294901760
      %v1458 = vsub.f32 %v365, %v1457
      %v1459 = vand.u32 %v1458, 4294901760
      %1460 = vmatprep.subr.mxu0 %v1459
      %v1461 = vand.u32 %v364, 4294901760
      %v1462 = vsub.f32 %v364, %v1461
      %v1463 = vand.u32 %v1462, 4294901760
      %1464 = vmatpush2.msra.mxu0 %v1463
      %v1465 = vand.u32 %v363, 4294901760
      %v1466 = vsub.f32 %v363, %v1465
      %v1467 = vand.u32 %v1466, 4294901760
      %1468 = vmatprep.subr.mxu0 %v1467
      %v1469 = vand.u32 %v362, 4294901760
      %v1470 = vsub.f32 %v362, %v1469
      %v1471 = vand.u32 %v1470, 4294901760
      %1472 = vmatpush2.msra.mxu0 %v1471
      %v1473 = vand.u32 %v361, 4294901760
      %v1474 = vsub.f32 %v361, %v1473
      %v1475 = vand.u32 %v1474, 4294901760
      %1476 = vmatprep.subr.mxu0 %v1475
      %v1477 = vand.u32 %v360, 4294901760
      %v1478 = vsub.f32 %v360, %v1477
      %v1479 = vand.u32 %v1478, 4294901760
      %1480 = vmatpush2.msra.mxu0 %v1479
      %v1481 = vand.u32 %v359, 4294901760
      %v1482 = vsub.f32 %v359, %v1481
      %v1483 = vand.u32 %v1482, 4294901760
      %1484 = vmatprep.subr.mxu0 %v1483
      %v1485 = vand.u32 %v358, 4294901760
      %v1486 = vsub.f32 %v358, %v1485
      %v1487 = vand.u32 %v1486, 4294901760
      %1488 = vmatpush2.msra.mxu0 %v1487
      %v1489 = vand.u32 %v357, 4294901760
      %v1490 = vsub.f32 %v357, %v1489
      %v1491 = vand.u32 %v1490, 4294901760
      %1492 = vmatprep.subr.mxu0 %v1491
      %v1493 = vand.u32 %v356, 4294901760
      %v1494 = vsub.f32 %v356, %v1493
      %v1495 = vand.u32 %v1494, 4294901760
      %1496 = vmatpush2.msra.mxu0 %v1495
      %v1497 = vand.u32 %v355, 4294901760
      %v1498 = vsub.f32 %v355, %v1497
      %v1499 = vand.u32 %v1498, 4294901760
      %1500 = vmatprep.subr.mxu0 %v1499
      %v1501 = vand.u32 %v354, 4294901760
      %v1502 = vsub.f32 %v354, %v1501
      %v1503 = vand.u32 %v1502, 4294901760
      %1504 = vmatpush2.msra.mxu0 %v1503
      %v1505 = vand.u32 %v353, 4294901760
      %v1506 = vsub.f32 %v353, %v1505
      %v1507 = vand.u32 %v1506, 4294901760
      %1508 = vmatprep.subr.mxu0 %v1507
      %v1509 = vand.u32 %v352, 4294901760
      %v1510 = vsub.f32 %v352, %v1509
      %v1511 = vand.u32 %v1510, 4294901760
      %1512 = vmatpush2.msra.mxu0 %v1511
      %v1513 = vand.u32 %v351, 4294901760
      %v1514 = vsub.f32 %v351, %v1513
      %v1515 = vand.u32 %v1514, 4294901760
      %1516 = vmatprep.subr.mxu0 %v1515
      %v1517 = vand.u32 %v350, 4294901760
      %v1518 = vsub.f32 %v350, %v1517
      %v1519 = vand.u32 %v1518, 4294901760
      %1520 = vmatpush2.msra.mxu0 %v1519
      %v1521 = vand.u32 %v349, 4294901760
      %v1522 = vsub.f32 %v349, %v1521
      %v1523 = vand.u32 %v1522, 4294901760
      %1524 = vmatprep.subr.mxu0 %v1523
      %v1525 = vand.u32 %v348, 4294901760
      %v1526 = vsub.f32 %v348, %v1525
      %v1527 = vand.u32 %v1526, 4294901760
      %1528 = vmatpush2.msra.mxu0 %v1527
      %v1529 = vand.u32 %v388, 4294901760
      %1530 = vmatprep.mubr.f32.mxu0 %v1529
      %v1531 = vand.u32 %v387, 4294901760
      %1532 = vmatmul.mubr.f32.gmra.mxu0 %v1531
      %v1533 = vpop.f32.mrf.mxu0
      %v1534 = vadd.f32 %v1269, %v1533
      %v1535 = vpop.f32.mrf.mxu0
      %v1536 = vadd.f32 %v1271, %v1535
      %1537 = vdwg.mxu0
      %v1538 = vand.u32 %v347, 4294901760
      %1539 = vmatprep.subr.mxu0 %v1538
      %v1540 = vand.u32 %v346, 4294901760
      %1541 = vmatpush1.msra.mxu0 %v1540
      %v1542 = vand.u32 %v345, 4294901760
      %1543 = vmatprep.subr.mxu0 %v1542
      %v1544 = vand.u32 %v344, 4294901760
      %1545 = vmatpush1.msra.mxu0 %v1544
      %v1546 = vand.u32 %v343, 4294901760
      %1547 = vmatprep.subr.mxu0 %v1546
      %v1548 = vand.u32 %v342, 4294901760
      %1549 = vmatpush1.msra.mxu0 %v1548
      %v1550 = vand.u32 %v341, 4294901760
      %1551 = vmatprep.subr.mxu0 %v1550
      %v1552 = vand.u32 %v340, 4294901760
      %1553 = vmatpush1.msra.mxu0 %v1552
      %v1554 = vand.u32 %v339, 4294901760
      %1555 = vmatprep.subr.mxu0 %v1554
      %v1556 = vand.u32 %v338, 4294901760
      %1557 = vmatpush1.msra.mxu0 %v1556
      %v1558 = vand.u32 %v337, 4294901760
      %1559 = vmatprep.subr.mxu0 %v1558
      %v1560 = vand.u32 %v336, 4294901760
      %1561 = vmatpush1.msra.mxu0 %v1560
      %v1562 = vand.u32 %v335, 4294901760
      %1563 = vmatprep.subr.mxu0 %v1562
      %v1564 = vand.u32 %v334, 4294901760
      %1565 = vmatpush1.msra.mxu0 %v1564
      %v1566 = vand.u32 %v333, 4294901760
      %1567 = vmatprep.subr.mxu0 %v1566
      %v1568 = vand.u32 %v332, 4294901760
      %1569 = vmatpush1.msra.mxu0 %v1568
      %v1570 = vand.u32 %v331, 4294901760
      %1571 = vmatprep.subr.mxu0 %v1570
      %v1572 = vand.u32 %v330, 4294901760
      %1573 = vmatpush1.msra.mxu0 %v1572
      %v1574 = vand.u32 %v329, 4294901760
      %1575 = vmatprep.subr.mxu0 %v1574
      %v1576 = vand.u32 %v328, 4294901760
      %1577 = vmatpush1.msra.mxu0 %v1576
      %v1578 = vand.u32 %v327, 4294901760
      %1579 = vmatprep.subr.mxu0 %v1578
      %v1580 = vand.u32 %v326, 4294901760
      %1581 = vmatpush1.msra.mxu0 %v1580
      %v1582 = vand.u32 %v325, 4294901760
      %1583 = vmatprep.subr.mxu0 %v1582
      %v1584 = vand.u32 %v324, 4294901760
      %1585 = vmatpush1.msra.mxu0 %v1584
      %v1586 = vand.u32 %v323, 4294901760
      %1587 = vmatprep.subr.mxu0 %v1586
      %v1588 = vand.u32 %v322, 4294901760
      %1589 = vmatpush1.msra.mxu0 %v1588
      %v1590 = vand.u32 %v321, 4294901760
      %1591 = vmatprep.subr.mxu0 %v1590
      %v1592 = vand.u32 %v320, 4294901760
      %1593 = vmatpush1.msra.mxu0 %v1592
      %v1594 = vand.u32 %v319, 4294901760
      %1595 = vmatprep.subr.mxu0 %v1594
      %v1596 = vand.u32 %v318, 4294901760
      %1597 = vmatpush1.msra.mxu0 %v1596
      %v1598 = vand.u32 %v317, 4294901760
      %1599 = vmatprep.subr.mxu0 %v1598
      %v1600 = vand.u32 %v316, 4294901760
      %1601 = vmatpush1.msra.mxu0 %v1600
      %v1602 = vand.u32 %v379, 4294901760
      %1603 = vmatprep.subr.mxu0 %v1602
      %v1604 = vand.u32 %v378, 4294901760
      %1605 = vmatpush2.msra.mxu0 %v1604
      %v1606 = vand.u32 %v377, 4294901760
      %1607 = vmatprep.subr.mxu0 %v1606
      %v1608 = vand.u32 %v376, 4294901760
      %1609 = vmatpush2.msra.mxu0 %v1608
      %v1610 = vand.u32 %v375, 4294901760
      %1611 = vmatprep.subr.mxu0 %v1610
      %v1612 = vand.u32 %v374, 4294901760
      %1613 = vmatpush2.msra.mxu0 %v1612
      %v1614 = vand.u32 %v373, 4294901760
      %1615 = vmatprep.subr.mxu0 %v1614
      %v1616 = vand.u32 %v372, 4294901760
      %1617 = vmatpush2.msra.mxu0 %v1616
      %v1618 = vand.u32 %v371, 4294901760
      %1619 = vmatprep.subr.mxu0 %v1618
      %v1620 = vand.u32 %v370, 4294901760
      %1621 = vmatpush2.msra.mxu0 %v1620
      %v1622 = vand.u32 %v369, 4294901760
      %1623 = vmatprep.subr.mxu0 %v1622
      %v1624 = vand.u32 %v368, 4294901760
      %1625 = vmatpush2.msra.mxu0 %v1624
      %v1626 = vand.u32 %v367, 4294901760
      %1627 = vmatprep.subr.mxu0 %v1626
      %v1628 = vand.u32 %v366, 4294901760
      %1629 = vmatpush2.msra.mxu0 %v1628
      %v1630 = vand.u32 %v365, 4294901760
      %1631 = vmatprep.subr.mxu0 %v1630
      %v1632 = vand.u32 %v364, 4294901760
      %1633 = vmatpush2.msra.mxu0 %v1632
      %v1634 = vand.u32 %v363, 4294901760
      %1635 = vmatprep.subr.mxu0 %v1634
      %v1636 = vand.u32 %v362, 4294901760
      %1637 = vmatpush2.msra.mxu0 %v1636
      %v1638 = vand.u32 %v361, 4294901760
      %1639 = vmatprep.subr.mxu0 %v1638
      %v1640 = vand.u32 %v360, 4294901760
      %1641 = vmatpush2.msra.mxu0 %v1640
      %v1642 = vand.u32 %v359, 4294901760
      %1643 = vmatprep.subr.mxu0 %v1642
      %v1644 = vand.u32 %v358, 4294901760
      %1645 = vmatpush2.msra.mxu0 %v1644
      %v1646 = vand.u32 %v357, 4294901760
      %1647 = vmatprep.subr.mxu0 %v1646
      %v1648 = vand.u32 %v356, 4294901760
      %1649 = vmatpush2.msra.mxu0 %v1648
      %v1650 = vand.u32 %v355, 4294901760
      %1651 = vmatprep.subr.mxu0 %v1650
      %v1652 = vand.u32 %v354, 4294901760
      %1653 = vmatpush2.msra.mxu0 %v1652
      %v1654 = vand.u32 %v353, 4294901760
      %1655 = vmatprep.subr.mxu0 %v1654
      %v1656 = vand.u32 %v352, 4294901760
      %1657 = vmatpush2.msra.mxu0 %v1656
      %v1658 = vand.u32 %v351, 4294901760
      %1659 = vmatprep.subr.mxu0 %v1658
      %v1660 = vand.u32 %v350, 4294901760
      %1661 = vmatpush2.msra.mxu0 %v1660
      %v1662 = vand.u32 %v349, 4294901760
      %1663 = vmatprep.subr.mxu0 %v1662
      %v1664 = vand.u32 %v348, 4294901760
      %1665 = vmatpush2.msra.mxu0 %v1664
      %v1666 = vand.u32 %v388, 4294901760
      %1667 = vmatprep.mubr.f32.mxu0 %v1666
      %v1668 = vand.u32 %v387, 4294901760
      %1669 = vmatmul.mubr.f32.gmra.mxu0 %v1668
      %v1670 = vpop.f32.mrf.mxu0
      %v1671 = vadd.f32 %v1534, %v1670
      %v1672 = vpop.f32.mrf.mxu0
      %v1673 = vadd.f32 %v1536, %v1672
      %1674 = vdwg.mxu0
      %v1677 = vunpack.c.l.s4 1983009808
      %v1678 = vunpack.c.0.s8 %v1677
      %v1679 = vlaneseq
      %v1680 = vshrl.u32 %v1679, 7
      %v1681 = vsub.s32 %v1678, %v1680
      %v1682 = vrot.slane %v249, %v1681
      %v1683 = vcombine.high %v1682, %v1682
      %v1686 = vand.u32 %v281, 4294901760
      %1687 = vmatprep.subr.mxu0 %v1686
      %v1688 = vand.u32 %v280, 4294901760
      %1689 = vmatpush1.msra.mxu0 %v1688
      %v1690 = vand.u32 %v279, 4294901760
      %1691 = vmatprep.subr.mxu0 %v1690
      %v1692 = vand.u32 %v278, 4294901760
      %1693 = vmatpush1.msra.mxu0 %v1692
      %v1694 = vand.u32 %v277, 4294901760
      %1695 = vmatprep.subr.mxu0 %v1694
      %v1696 = vand.u32 %v276, 4294901760
      %1697 = vmatpush1.msra.mxu0 %v1696
      %v1698 = vand.u32 %v275, 4294901760
      %1699 = vmatprep.subr.mxu0 %v1698
      %v1700 = vand.u32 %v274, 4294901760
      %1701 = vmatpush1.msra.mxu0 %v1700
      %v1702 = vand.u32 %v273, 4294901760
      %1703 = vmatprep.subr.mxu0 %v1702
      %v1704 = vand.u32 %v272, 4294901760
      %1705 = vmatpush1.msra.mxu0 %v1704
      %v1706 = vand.u32 %v271, 4294901760
      %1707 = vmatprep.subr.mxu0 %v1706
      %v1708 = vand.u32 %v270, 4294901760
      %1709 = vmatpush1.msra.mxu0 %v1708
      %v1710 = vand.u32 %v269, 4294901760
      %1711 = vmatprep.subr.mxu0 %v1710
      %v1712 = vand.u32 %v268, 4294901760
      %1713 = vmatpush1.msra.mxu0 %v1712
      %v1714 = vand.u32 %v267, 4294901760
      %1715 = vmatprep.subr.mxu0 %v1714
      %v1716 = vand.u32 %v266, 4294901760
      %1717 = vmatpush1.msra.mxu0 %v1716
      %v1718 = vand.u32 %v265, 4294901760
      %1719 = vmatprep.subr.mxu0 %v1718
      %v1720 = vand.u32 %v264, 4294901760
      %1721 = vmatpush1.msra.mxu0 %v1720
      %v1722 = vand.u32 %v263, 4294901760
      %1723 = vmatprep.subr.mxu0 %v1722
      %v1724 = vand.u32 %v262, 4294901760
      %1725 = vmatpush1.msra.mxu0 %v1724
      %v1726 = vand.u32 %v261, 4294901760
      %1727 = vmatprep.subr.mxu0 %v1726
      %v1728 = vand.u32 %v260, 4294901760
      %1729 = vmatpush1.msra.mxu0 %v1728
      %v1730 = vand.u32 %v259, 4294901760
      %1731 = vmatprep.subr.mxu0 %v1730
      %v1732 = vand.u32 %v258, 4294901760
      %1733 = vmatpush1.msra.mxu0 %v1732
      %v1734 = vand.u32 %v257, 4294901760
      %1735 = vmatprep.subr.mxu0 %v1734
      %v1736 = vand.u32 %v256, 4294901760
      %1737 = vmatpush1.msra.mxu0 %v1736
      %v1738 = vand.u32 %v255, 4294901760
      %1739 = vmatprep.subr.mxu0 %v1738
      %v1740 = vand.u32 %v254, 4294901760
      %1741 = vmatpush1.msra.mxu0 %v1740
      %v1742 = vand.u32 %v253, 4294901760
      %1743 = vmatprep.subr.mxu0 %v1742
      %v1744 = vand.u32 %v252, 4294901760
      %1745 = vmatpush1.msra.mxu0 %v1744
      %v1746 = vand.u32 %v251, 4294901760
      %1747 = vmatprep.subr.mxu0 %v1746
      %v1748 = vand.u32 %v250, 4294901760
      %1749 = vmatpush1.msra.mxu0 %v1748
      %v1750 = vand.u32 %v313, 4294901760
      %1751 = vmatprep.subr.mxu0 %v1750
      %v1752 = vand.u32 %v312, 4294901760
      %1753 = vmatpush2.msra.mxu0 %v1752
      %v1754 = vand.u32 %v311, 4294901760
      %1755 = vmatprep.subr.mxu0 %v1754
      %v1756 = vand.u32 %v310, 4294901760
      %1757 = vmatpush2.msra.mxu0 %v1756
      %v1758 = vand.u32 %v309, 4294901760
      %1759 = vmatprep.subr.mxu0 %v1758
      %v1760 = vand.u32 %v308, 4294901760
      %1761 = vmatpush2.msra.mxu0 %v1760
      %v1762 = vand.u32 %v307, 4294901760
      %1763 = vmatprep.subr.mxu0 %v1762
      %v1764 = vand.u32 %v306, 4294901760
      %1765 = vmatpush2.msra.mxu0 %v1764
      %v1766 = vand.u32 %v305, 4294901760
      %1767 = vmatprep.subr.mxu0 %v1766
      %v1768 = vand.u32 %v304, 4294901760
      %1769 = vmatpush2.msra.mxu0 %v1768
      %v1770 = vand.u32 %v303, 4294901760
      %1771 = vmatprep.subr.mxu0 %v1770
      %v1772 = vand.u32 %v302, 4294901760
      %1773 = vmatpush2.msra.mxu0 %v1772
      %v1774 = vand.u32 %v301, 4294901760
      %1775 = vmatprep.subr.mxu0 %v1774
      %v1776 = vand.u32 %v300, 4294901760
      %1777 = vmatpush2.msra.mxu0 %v1776
      %v1778 = vand.u32 %v299, 4294901760
      %1779 = vmatprep.subr.mxu0 %v1778
      %v1780 = vand.u32 %v298, 4294901760
      %1781 = vmatpush2.msra.mxu0 %v1780
      %v1782 = vand.u32 %v297, 4294901760
      %1783 = vmatprep.subr.mxu0 %v1782
      %v1784 = vand.u32 %v296, 4294901760
      %1785 = vmatpush2.msra.mxu0 %v1784
      %v1786 = vand.u32 %v295, 4294901760
      %1787 = vmatprep.subr.mxu0 %v1786
      %v1788 = vand.u32 %v294, 4294901760
      %1789 = vmatpush2.msra.mxu0 %v1788
      %v1790 = vand.u32 %v293, 4294901760
      %1791 = vmatprep.subr.mxu0 %v1790
      %v1792 = vand.u32 %v292, 4294901760
      %1793 = vmatpush2.msra.mxu0 %v1792
      %v1794 = vand.u32 %v291, 4294901760
      %1795 = vmatprep.subr.mxu0 %v1794
      %v1796 = vand.u32 %v290, 4294901760
      %1797 = vmatpush2.msra.mxu0 %v1796
      %v1798 = vand.u32 %v289, 4294901760
      %1799 = vmatprep.subr.mxu0 %v1798
      %v1800 = vand.u32 %v288, 4294901760
      %1801 = vmatpush2.msra.mxu0 %v1800
      %v1802 = vand.u32 %v287, 4294901760
      %1803 = vmatprep.subr.mxu0 %v1802
      %v1804 = vand.u32 %v286, 4294901760
      %1805 = vmatpush2.msra.mxu0 %v1804
      %v1806 = vand.u32 %v285, 4294901760
      %1807 = vmatprep.subr.mxu0 %v1806
      %v1808 = vand.u32 %v284, 4294901760
      %1809 = vmatpush2.msra.mxu0 %v1808
      %v1810 = vand.u32 %v283, 4294901760
      %1811 = vmatprep.subr.mxu0 %v1810
      %v1812 = vand.u32 %v282, 4294901760
      %1813 = vmatpush2.msra.mxu0 %v1812
      %v1814 = vand.u32 %v1683, 4294901760
      %v1815 = vsub.f32 %v1683, %v1814
      %v1816 = vand.u32 %v1815, 4294901760
      %v1817 = vsub.f32 %v1815, %v1816
      %v1818 = vand.u32 %v1817, 4294901760
      %1819 = vmatprep.mubr.f32.mxu0 %v1818
      %v1820 = vand.u32 %v1682, 4294901760
      %v1821 = vsub.f32 %v1682, %v1820
      %v1822 = vand.u32 %v1821, 4294901760
      %v1823 = vsub.f32 %v1821, %v1822
      %v1824 = vand.u32 %v1823, 4294901760
      %1825 = vmatmul.mubr.f32.gmra.mxu0 %v1824
      %v1826 = vpop.f32.mrf.mxu0
      %v1827 = vadd.f32 %v1671, %v1826
      %v1828 = vpop.f32.mrf.mxu0
      %v1829 = vadd.f32 %v1673, %v1828
      %1830 = vdwg.mxu0
      %v1831 = vand.u32 %v281, 4294901760
      %v1832 = vsub.f32 %v281, %v1831
      %v1833 = vand.u32 %v1832, 4294901760
      %v1834 = vsub.f32 %v1832, %v1833
      %v1835 = vand.u32 %v1834, 4294901760
      %1836 = vmatprep.subr.mxu0 %v1835
      %v1837 = vand.u32 %v280, 4294901760
      %v1838 = vsub.f32 %v280, %v1837
      %v1839 = vand.u32 %v1838, 4294901760
      %v1840 = vsub.f32 %v1838, %v1839
      %v1841 = vand.u32 %v1840, 4294901760
      %1842 = vmatpush1.msra.mxu0 %v1841
      %v1843 = vand.u32 %v279, 4294901760
      %v1844 = vsub.f32 %v279, %v1843
      %v1845 = vand.u32 %v1844, 4294901760
      %v1846 = vsub.f32 %v1844, %v1845
      %v1847 = vand.u32 %v1846, 4294901760
      %1848 = vmatprep.subr.mxu0 %v1847
      %v1849 = vand.u32 %v278, 4294901760
      %v1850 = vsub.f32 %v278, %v1849
      %v1851 = vand.u32 %v1850, 4294901760
      %v1852 = vsub.f32 %v1850, %v1851
      %v1853 = vand.u32 %v1852, 4294901760
      %1854 = vmatpush1.msra.mxu0 %v1853
      %v1855 = vand.u32 %v277, 4294901760
      %v1856 = vsub.f32 %v277, %v1855
      %v1857 = vand.u32 %v1856, 4294901760
      %v1858 = vsub.f32 %v1856, %v1857
      %v1859 = vand.u32 %v1858, 4294901760
      %1860 = vmatprep.subr.mxu0 %v1859
      %v1861 = vand.u32 %v276, 4294901760
      %v1862 = vsub.f32 %v276, %v1861
      %v1863 = vand.u32 %v1862, 4294901760
      %v1864 = vsub.f32 %v1862, %v1863
      %v1865 = vand.u32 %v1864, 4294901760
      %1866 = vmatpush1.msra.mxu0 %v1865
      %v1867 = vand.u32 %v275, 4294901760
      %v1868 = vsub.f32 %v275, %v1867
      %v1869 = vand.u32 %v1868, 4294901760
      %v1870 = vsub.f32 %v1868, %v1869
      %v1871 = vand.u32 %v1870, 4294901760
      %1872 = vmatprep.subr.mxu0 %v1871
      %v1873 = vand.u32 %v274, 4294901760
      %v1874 = vsub.f32 %v274, %v1873
      %v1875 = vand.u32 %v1874, 4294901760
      %v1876 = vsub.f32 %v1874, %v1875
      %v1877 = vand.u32 %v1876, 4294901760
      %1878 = vmatpush1.msra.mxu0 %v1877
      %v1879 = vand.u32 %v273, 4294901760
      %v1880 = vsub.f32 %v273, %v1879
      %v1881 = vand.u32 %v1880, 4294901760
      %v1882 = vsub.f32 %v1880, %v1881
      %v1883 = vand.u32 %v1882, 4294901760
      %1884 = vmatprep.subr.mxu0 %v1883
      %v1885 = vand.u32 %v272, 4294901760
      %v1886 = vsub.f32 %v272, %v1885
      %v1887 = vand.u32 %v1886, 4294901760
      %v1888 = vsub.f32 %v1886, %v1887
      %v1889 = vand.u32 %v1888, 4294901760
      %1890 = vmatpush1.msra.mxu0 %v1889
      %v1891 = vand.u32 %v271, 4294901760
      %v1892 = vsub.f32 %v271, %v1891
      %v1893 = vand.u32 %v1892, 4294901760
      %v1894 = vsub.f32 %v1892, %v1893
      %v1895 = vand.u32 %v1894, 4294901760
      %1896 = vmatprep.subr.mxu0 %v1895
      %v1897 = vand.u32 %v270, 4294901760
      %v1898 = vsub.f32 %v270, %v1897
      %v1899 = vand.u32 %v1898, 4294901760
      %v1900 = vsub.f32 %v1898, %v1899
      %v1901 = vand.u32 %v1900, 4294901760
      %1902 = vmatpush1.msra.mxu0 %v1901
      %v1903 = vand.u32 %v269, 4294901760
      %v1904 = vsub.f32 %v269, %v1903
      %v1905 = vand.u32 %v1904, 4294901760
      %v1906 = vsub.f32 %v1904, %v1905
      %v1907 = vand.u32 %v1906, 4294901760
      %1908 = vmatprep.subr.mxu0 %v1907
      %v1909 = vand.u32 %v268, 4294901760
      %v1910 = vsub.f32 %v268, %v1909
      %v1911 = vand.u32 %v1910, 4294901760
      %v1912 = vsub.f32 %v1910, %v1911
      %v1913 = vand.u32 %v1912, 4294901760
      %1914 = vmatpush1.msra.mxu0 %v1913
      %v1915 = vand.u32 %v267, 4294901760
      %v1916 = vsub.f32 %v267, %v1915
      %v1917 = vand.u32 %v1916, 4294901760
      %v1918 = vsub.f32 %v1916, %v1917
      %v1919 = vand.u32 %v1918, 4294901760
      %1920 = vmatprep.subr.mxu0 %v1919
      %v1921 = vand.u32 %v266, 4294901760
      %v1922 = vsub.f32 %v266, %v1921
      %v1923 = vand.u32 %v1922, 4294901760
      %v1924 = vsub.f32 %v1922, %v1923
      %v1925 = vand.u32 %v1924, 4294901760
      %1926 = vmatpush1.msra.mxu0 %v1925
      %v1927 = vand.u32 %v265, 4294901760
      %v1928 = vsub.f32 %v265, %v1927
      %v1929 = vand.u32 %v1928, 4294901760
      %v1930 = vsub.f32 %v1928, %v1929
      %v1931 = vand.u32 %v1930, 4294901760
      %1932 = vmatprep.subr.mxu0 %v1931
      %v1933 = vand.u32 %v264, 4294901760
      %v1934 = vsub.f32 %v264, %v1933
      %v1935 = vand.u32 %v1934, 4294901760
      %v1936 = vsub.f32 %v1934, %v1935
      %v1937 = vand.u32 %v1936, 4294901760
      %1938 = vmatpush1.msra.mxu0 %v1937
      %v1939 = vand.u32 %v263, 4294901760
      %v1940 = vsub.f32 %v263, %v1939
      %v1941 = vand.u32 %v1940, 4294901760
      %v1942 = vsub.f32 %v1940, %v1941
      %v1943 = vand.u32 %v1942, 4294901760
      %1944 = vmatprep.subr.mxu0 %v1943
      %v1945 = vand.u32 %v262, 4294901760
      %v1946 = vsub.f32 %v262, %v1945
      %v1947 = vand.u32 %v1946, 4294901760
      %v1948 = vsub.f32 %v1946, %v1947
      %v1949 = vand.u32 %v1948, 4294901760
      %1950 = vmatpush1.msra.mxu0 %v1949
      %v1951 = vand.u32 %v261, 4294901760
      %v1952 = vsub.f32 %v261, %v1951
      %v1953 = vand.u32 %v1952, 4294901760
      %v1954 = vsub.f32 %v1952, %v1953
      %v1955 = vand.u32 %v1954, 4294901760
      %1956 = vmatprep.subr.mxu0 %v1955
      %v1957 = vand.u32 %v260, 4294901760
      %v1958 = vsub.f32 %v260, %v1957
      %v1959 = vand.u32 %v1958, 4294901760
      %v1960 = vsub.f32 %v1958, %v1959
      %v1961 = vand.u32 %v1960, 4294901760
      %1962 = vmatpush1.msra.mxu0 %v1961
      %v1963 = vand.u32 %v259, 4294901760
      %v1964 = vsub.f32 %v259, %v1963
      %v1965 = vand.u32 %v1964, 4294901760
      %v1966 = vsub.f32 %v1964, %v1965
      %v1967 = vand.u32 %v1966, 4294901760
      %1968 = vmatprep.subr.mxu0 %v1967
      %v1969 = vand.u32 %v258, 4294901760
      %v1970 = vsub.f32 %v258, %v1969
      %v1971 = vand.u32 %v1970, 4294901760
      %v1972 = vsub.f32 %v1970, %v1971
      %v1973 = vand.u32 %v1972, 4294901760
      %1974 = vmatpush1.msra.mxu0 %v1973
      %v1975 = vand.u32 %v257, 4294901760
      %v1976 = vsub.f32 %v257, %v1975
      %v1977 = vand.u32 %v1976, 4294901760
      %v1978 = vsub.f32 %v1976, %v1977
      %v1979 = vand.u32 %v1978, 4294901760
      %1980 = vmatprep.subr.mxu0 %v1979
      %v1981 = vand.u32 %v256, 4294901760
      %v1982 = vsub.f32 %v256, %v1981
      %v1983 = vand.u32 %v1982, 4294901760
      %v1984 = vsub.f32 %v1982, %v1983
      %v1985 = vand.u32 %v1984, 4294901760
      %1986 = vmatpush1.msra.mxu0 %v1985
      %v1987 = vand.u32 %v255, 4294901760
      %v1988 = vsub.f32 %v255, %v1987
      %v1989 = vand.u32 %v1988, 4294901760
      %v1990 = vsub.f32 %v1988, %v1989
      %v1991 = vand.u32 %v1990, 4294901760
      %1992 = vmatprep.subr.mxu0 %v1991
      %v1993 = vand.u32 %v254, 4294901760
      %v1994 = vsub.f32 %v254, %v1993
      %v1995 = vand.u32 %v1994, 4294901760
      %v1996 = vsub.f32 %v1994, %v1995
      %v1997 = vand.u32 %v1996, 4294901760
      %1998 = vmatpush1.msra.mxu0 %v1997
      %v1999 = vand.u32 %v253, 4294901760
      %v2000 = vsub.f32 %v253, %v1999
      %v2001 = vand.u32 %v2000, 4294901760
      %v2002 = vsub.f32 %v2000, %v2001
      %v2003 = vand.u32 %v2002, 4294901760
      %2004 = vmatprep.subr.mxu0 %v2003
      %v2005 = vand.u32 %v252, 4294901760
      %v2006 = vsub.f32 %v252, %v2005
      %v2007 = vand.u32 %v2006, 4294901760
      %v2008 = vsub.f32 %v2006, %v2007
      %v2009 = vand.u32 %v2008, 4294901760
      %2010 = vmatpush1.msra.mxu0 %v2009
      %v2011 = vand.u32 %v251, 4294901760
      %v2012 = vsub.f32 %v251, %v2011
      %v2013 = vand.u32 %v2012, 4294901760
      %v2014 = vsub.f32 %v2012, %v2013
      %v2015 = vand.u32 %v2014, 4294901760
      %2016 = vmatprep.subr.mxu0 %v2015
      %v2017 = vand.u32 %v250, 4294901760
      %v2018 = vsub.f32 %v250, %v2017
      %v2019 = vand.u32 %v2018, 4294901760
      %v2020 = vsub.f32 %v2018, %v2019
      %v2021 = vand.u32 %v2020, 4294901760
      %2022 = vmatpush1.msra.mxu0 %v2021
      %v2023 = vand.u32 %v313, 4294901760
      %v2024 = vsub.f32 %v313, %v2023
      %v2025 = vand.u32 %v2024, 4294901760
      %v2026 = vsub.f32 %v2024, %v2025
      %v2027 = vand.u32 %v2026, 4294901760
      %2028 = vmatprep.subr.mxu0 %v2027
      %v2029 = vand.u32 %v312, 4294901760
      %v2030 = vsub.f32 %v312, %v2029
      %v2031 = vand.u32 %v2030, 4294901760
      %v2032 = vsub.f32 %v2030, %v2031
      %v2033 = vand.u32 %v2032, 4294901760
      %2034 = vmatpush2.msra.mxu0 %v2033
      %v2035 = vand.u32 %v311, 4294901760
      %v2036 = vsub.f32 %v311, %v2035
      %v2037 = vand.u32 %v2036, 4294901760
      %v2038 = vsub.f32 %v2036, %v2037
      %v2039 = vand.u32 %v2038, 4294901760
      %2040 = vmatprep.subr.mxu0 %v2039
      %v2041 = vand.u32 %v310, 4294901760
      %v2042 = vsub.f32 %v310, %v2041
      %v2043 = vand.u32 %v2042, 4294901760
      %v2044 = vsub.f32 %v2042, %v2043
      %v2045 = vand.u32 %v2044, 4294901760
      %2046 = vmatpush2.msra.mxu0 %v2045
      %v2047 = vand.u32 %v309, 4294901760
      %v2048 = vsub.f32 %v309, %v2047
      %v2049 = vand.u32 %v2048, 4294901760
      %v2050 = vsub.f32 %v2048, %v2049
      %v2051 = vand.u32 %v2050, 4294901760
      %2052 = vmatprep.subr.mxu0 %v2051
      %v2053 = vand.u32 %v308, 4294901760
      %v2054 = vsub.f32 %v308, %v2053
      %v2055 = vand.u32 %v2054, 4294901760
      %v2056 = vsub.f32 %v2054, %v2055
      %v2057 = vand.u32 %v2056, 4294901760
      %2058 = vmatpush2.msra.mxu0 %v2057
      %v2059 = vand.u32 %v307, 4294901760
      %v2060 = vsub.f32 %v307, %v2059
      %v2061 = vand.u32 %v2060, 4294901760
      %v2062 = vsub.f32 %v2060, %v2061
      %v2063 = vand.u32 %v2062, 4294901760
      %2064 = vmatprep.subr.mxu0 %v2063
      %v2065 = vand.u32 %v306, 4294901760
      %v2066 = vsub.f32 %v306, %v2065
      %v2067 = vand.u32 %v2066, 4294901760
      %v2068 = vsub.f32 %v2066, %v2067
      %v2069 = vand.u32 %v2068, 4294901760
      %2070 = vmatpush2.msra.mxu0 %v2069
      %v2071 = vand.u32 %v305, 4294901760
      %v2072 = vsub.f32 %v305, %v2071
      %v2073 = vand.u32 %v2072, 4294901760
      %v2074 = vsub.f32 %v2072, %v2073
      %v2075 = vand.u32 %v2074, 4294901760
      %2076 = vmatprep.subr.mxu0 %v2075
      %v2077 = vand.u32 %v304, 4294901760
      %v2078 = vsub.f32 %v304, %v2077
      %v2079 = vand.u32 %v2078, 4294901760
      %v2080 = vsub.f32 %v2078, %v2079
      %v2081 = vand.u32 %v2080, 4294901760
      %2082 = vmatpush2.msra.mxu0 %v2081
      %v2083 = vand.u32 %v303, 4294901760
      %v2084 = vsub.f32 %v303, %v2083
      %v2085 = vand.u32 %v2084, 4294901760
      %v2086 = vsub.f32 %v2084, %v2085
      %v2087 = vand.u32 %v2086, 4294901760
      %2088 = vmatprep.subr.mxu0 %v2087
      %v2089 = vand.u32 %v302, 4294901760
      %v2090 = vsub.f32 %v302, %v2089
      %v2091 = vand.u32 %v2090, 4294901760
      %v2092 = vsub.f32 %v2090, %v2091
      %v2093 = vand.u32 %v2092, 4294901760
      %2094 = vmatpush2.msra.mxu0 %v2093
      %v2095 = vand.u32 %v301, 4294901760
      %v2096 = vsub.f32 %v301, %v2095
      %v2097 = vand.u32 %v2096, 4294901760
      %v2098 = vsub.f32 %v2096, %v2097
      %v2099 = vand.u32 %v2098, 4294901760
      %2100 = vmatprep.subr.mxu0 %v2099
      %v2101 = vand.u32 %v300, 4294901760
      %v2102 = vsub.f32 %v300, %v2101
      %v2103 = vand.u32 %v2102, 4294901760
      %v2104 = vsub.f32 %v2102, %v2103
      %v2105 = vand.u32 %v2104, 4294901760
      %2106 = vmatpush2.msra.mxu0 %v2105
      %v2107 = vand.u32 %v299, 4294901760
      %v2108 = vsub.f32 %v299, %v2107
      %v2109 = vand.u32 %v2108, 4294901760
      %v2110 = vsub.f32 %v2108, %v2109
      %v2111 = vand.u32 %v2110, 4294901760
      %2112 = vmatprep.subr.mxu0 %v2111
      %v2113 = vand.u32 %v298, 4294901760
      %v2114 = vsub.f32 %v298, %v2113
      %v2115 = vand.u32 %v2114, 4294901760
      %v2116 = vsub.f32 %v2114, %v2115
      %v2117 = vand.u32 %v2116, 4294901760
      %2118 = vmatpush2.msra.mxu0 %v2117
      %v2119 = vand.u32 %v297, 4294901760
      %v2120 = vsub.f32 %v297, %v2119
      %v2121 = vand.u32 %v2120, 4294901760
      %v2122 = vsub.f32 %v2120, %v2121
      %v2123 = vand.u32 %v2122, 4294901760
      %2124 = vmatprep.subr.mxu0 %v2123
      %v2125 = vand.u32 %v296, 4294901760
      %v2126 = vsub.f32 %v296, %v2125
      %v2127 = vand.u32 %v2126, 4294901760
      %v2128 = vsub.f32 %v2126, %v2127
      %v2129 = vand.u32 %v2128, 4294901760
      %2130 = vmatpush2.msra.mxu0 %v2129
      %v2131 = vand.u32 %v295, 4294901760
      %v2132 = vsub.f32 %v295, %v2131
      %v2133 = vand.u32 %v2132, 4294901760
      %v2134 = vsub.f32 %v2132, %v2133
      %v2135 = vand.u32 %v2134, 4294901760
      %2136 = vmatprep.subr.mxu0 %v2135
      %v2137 = vand.u32 %v294, 4294901760
      %v2138 = vsub.f32 %v294, %v2137
      %v2139 = vand.u32 %v2138, 4294901760
      %v2140 = vsub.f32 %v2138, %v2139
      %v2141 = vand.u32 %v2140, 4294901760
      %2142 = vmatpush2.msra.mxu0 %v2141
      %v2143 = vand.u32 %v293, 4294901760
      %v2144 = vsub.f32 %v293, %v2143
      %v2145 = vand.u32 %v2144, 4294901760
      %v2146 = vsub.f32 %v2144, %v2145
      %v2147 = vand.u32 %v2146, 4294901760
      %2148 = vmatprep.subr.mxu0 %v2147
      %v2149 = vand.u32 %v292, 4294901760
      %v2150 = vsub.f32 %v292, %v2149
      %v2151 = vand.u32 %v2150, 4294901760
      %v2152 = vsub.f32 %v2150, %v2151
      %v2153 = vand.u32 %v2152, 4294901760
      %2154 = vmatpush2.msra.mxu0 %v2153
      %v2155 = vand.u32 %v291, 4294901760
      %v2156 = vsub.f32 %v291, %v2155
      %v2157 = vand.u32 %v2156, 4294901760
      %v2158 = vsub.f32 %v2156, %v2157
      %v2159 = vand.u32 %v2158, 4294901760
      %2160 = vmatprep.subr.mxu0 %v2159
      %v2161 = vand.u32 %v290, 4294901760
      %v2162 = vsub.f32 %v290, %v2161
      %v2163 = vand.u32 %v2162, 4294901760
      %v2164 = vsub.f32 %v2162, %v2163
      %v2165 = vand.u32 %v2164, 4294901760
      %2166 = vmatpush2.msra.mxu0 %v2165
      %v2167 = vand.u32 %v289, 4294901760
      %v2168 = vsub.f32 %v289, %v2167
      %v2169 = vand.u32 %v2168, 4294901760
      %v2170 = vsub.f32 %v2168, %v2169
      %v2171 = vand.u32 %v2170, 4294901760
      %2172 = vmatprep.subr.mxu0 %v2171
      %v2173 = vand.u32 %v288, 4294901760
      %v2174 = vsub.f32 %v288, %v2173
      %v2175 = vand.u32 %v2174, 4294901760
      %v2176 = vsub.f32 %v2174, %v2175
      %v2177 = vand.u32 %v2176, 4294901760
      %2178 = vmatpush2.msra.mxu0 %v2177
      %v2179 = vand.u32 %v287, 4294901760
      %v2180 = vsub.f32 %v287, %v2179
      %v2181 = vand.u32 %v2180, 4294901760
      %v2182 = vsub.f32 %v2180, %v2181
      %v2183 = vand.u32 %v2182, 4294901760
      %2184 = vmatprep.subr.mxu0 %v2183
      %v2185 = vand.u32 %v286, 4294901760
      %v2186 = vsub.f32 %v286, %v2185
      %v2187 = vand.u32 %v2186, 4294901760
      %v2188 = vsub.f32 %v2186, %v2187
      %v2189 = vand.u32 %v2188, 4294901760
      %2190 = vmatpush2.msra.mxu0 %v2189
      %v2191 = vand.u32 %v285, 4294901760
      %v2192 = vsub.f32 %v285, %v2191
      %v2193 = vand.u32 %v2192, 4294901760
      %v2194 = vsub.f32 %v2192, %v2193
      %v2195 = vand.u32 %v2194, 4294901760
      %2196 = vmatprep.subr.mxu0 %v2195
      %v2197 = vand.u32 %v284, 4294901760
      %v2198 = vsub.f32 %v284, %v2197
      %v2199 = vand.u32 %v2198, 4294901760
      %v2200 = vsub.f32 %v2198, %v2199
      %v2201 = vand.u32 %v2200, 4294901760
      %2202 = vmatpush2.msra.mxu0 %v2201
      %v2203 = vand.u32 %v283, 4294901760
      %v2204 = vsub.f32 %v283, %v2203
      %v2205 = vand.u32 %v2204, 4294901760
      %v2206 = vsub.f32 %v2204, %v2205
      %v2207 = vand.u32 %v2206, 4294901760
      %2208 = vmatprep.subr.mxu0 %v2207
      %v2209 = vand.u32 %v282, 4294901760
      %v2210 = vsub.f32 %v282, %v2209
      %v2211 = vand.u32 %v2210, 4294901760
      %v2212 = vsub.f32 %v2210, %v2211
      %v2213 = vand.u32 %v2212, 4294901760
      %2214 = vmatpush2.msra.mxu0 %v2213
      %v2215 = vand.u32 %v1683, 4294901760
      %2216 = vmatprep.mubr.f32.mxu0 %v2215
      %v2217 = vand.u32 %v1682, 4294901760
      %2218 = vmatmul.mubr.f32.gmra.mxu0 %v2217
      %v2219 = vpop.f32.mrf.mxu0
      %v2220 = vadd.f32 %v1827, %v2219
      %v2221 = vpop.f32.mrf.mxu0
      %v2222 = vadd.f32 %v1829, %v2221
      %2223 = vdwg.mxu0
      %v2224 = vand.u32 %v281, 4294901760
      %v2225 = vsub.f32 %v281, %v2224
      %2226 = vmatprep.subr.mxu0 %v2225
      %v2227 = vand.u32 %v280, 4294901760
      %v2228 = vsub.f32 %v280, %v2227
      %2229 = vmatpush1.msra.mxu0 %v2228
      %v2230 = vand.u32 %v279, 4294901760
      %v2231 = vsub.f32 %v279, %v2230
      %2232 = vmatprep.subr.mxu0 %v2231
      %v2233 = vand.u32 %v278, 4294901760
      %v2234 = vsub.f32 %v278, %v2233
      %2235 = vmatpush1.msra.mxu0 %v2234
      %v2236 = vand.u32 %v277, 4294901760
      %v2237 = vsub.f32 %v277, %v2236
      %2238 = vmatprep.subr.mxu0 %v2237
      %v2239 = vand.u32 %v276, 4294901760
      %v2240 = vsub.f32 %v276, %v2239
      %2241 = vmatpush1.msra.mxu0 %v2240
      %v2242 = vand.u32 %v275, 4294901760
      %v2243 = vsub.f32 %v275, %v2242
      %2244 = vmatprep.subr.mxu0 %v2243
      %v2245 = vand.u32 %v274, 4294901760
      %v2246 = vsub.f32 %v274, %v2245
      %2247 = vmatpush1.msra.mxu0 %v2246
      %v2248 = vand.u32 %v273, 4294901760
      %v2249 = vsub.f32 %v273, %v2248
      %2250 = vmatprep.subr.mxu0 %v2249
      %v2251 = vand.u32 %v272, 4294901760
      %v2252 = vsub.f32 %v272, %v2251
      %2253 = vmatpush1.msra.mxu0 %v2252
      %v2254 = vand.u32 %v271, 4294901760
      %v2255 = vsub.f32 %v271, %v2254
      %2256 = vmatprep.subr.mxu0 %v2255
      %v2257 = vand.u32 %v270, 4294901760
      %v2258 = vsub.f32 %v270, %v2257
      %2259 = vmatpush1.msra.mxu0 %v2258
      %v2260 = vand.u32 %v269, 4294901760
      %v2261 = vsub.f32 %v269, %v2260
      %2262 = vmatprep.subr.mxu0 %v2261
      %v2263 = vand.u32 %v268, 4294901760
      %v2264 = vsub.f32 %v268, %v2263
      %2265 = vmatpush1.msra.mxu0 %v2264
      %v2266 = vand.u32 %v267, 4294901760
      %v2267 = vsub.f32 %v267, %v2266
      %2268 = vmatprep.subr.mxu0 %v2267
      %v2269 = vand.u32 %v266, 4294901760
      %v2270 = vsub.f32 %v266, %v2269
      %2271 = vmatpush1.msra.mxu0 %v2270
      %v2272 = vand.u32 %v265, 4294901760
      %v2273 = vsub.f32 %v265, %v2272
      %2274 = vmatprep.subr.mxu0 %v2273
      %v2275 = vand.u32 %v264, 4294901760
      %v2276 = vsub.f32 %v264, %v2275
      %2277 = vmatpush1.msra.mxu0 %v2276
      %v2278 = vand.u32 %v263, 4294901760
      %v2279 = vsub.f32 %v263, %v2278
      %2280 = vmatprep.subr.mxu0 %v2279
      %v2281 = vand.u32 %v262, 4294901760
      %v2282 = vsub.f32 %v262, %v2281
      %2283 = vmatpush1.msra.mxu0 %v2282
      %v2284 = vand.u32 %v261, 4294901760
      %v2285 = vsub.f32 %v261, %v2284
      %2286 = vmatprep.subr.mxu0 %v2285
      %v2287 = vand.u32 %v260, 4294901760
      %v2288 = vsub.f32 %v260, %v2287
      %2289 = vmatpush1.msra.mxu0 %v2288
      %v2290 = vand.u32 %v259, 4294901760
      %v2291 = vsub.f32 %v259, %v2290
      %2292 = vmatprep.subr.mxu0 %v2291
      %v2293 = vand.u32 %v258, 4294901760
      %v2294 = vsub.f32 %v258, %v2293
      %2295 = vmatpush1.msra.mxu0 %v2294
      %v2296 = vand.u32 %v257, 4294901760
      %v2297 = vsub.f32 %v257, %v2296
      %2298 = vmatprep.subr.mxu0 %v2297
      %v2299 = vand.u32 %v256, 4294901760
      %v2300 = vsub.f32 %v256, %v2299
      %2301 = vmatpush1.msra.mxu0 %v2300
      %v2302 = vand.u32 %v255, 4294901760
      %v2303 = vsub.f32 %v255, %v2302
      %2304 = vmatprep.subr.mxu0 %v2303
      %v2305 = vand.u32 %v254, 4294901760
      %v2306 = vsub.f32 %v254, %v2305
      %2307 = vmatpush1.msra.mxu0 %v2306
      %v2308 = vand.u32 %v253, 4294901760
      %v2309 = vsub.f32 %v253, %v2308
      %2310 = vmatprep.subr.mxu0 %v2309
      %v2311 = vand.u32 %v252, 4294901760
      %v2312 = vsub.f32 %v252, %v2311
      %2313 = vmatpush1.msra.mxu0 %v2312
      %v2314 = vand.u32 %v251, 4294901760
      %v2315 = vsub.f32 %v251, %v2314
      %2316 = vmatprep.subr.mxu0 %v2315
      %v2317 = vand.u32 %v250, 4294901760
      %v2318 = vsub.f32 %v250, %v2317
      %2319 = vmatpush1.msra.mxu0 %v2318
      %v2320 = vand.u32 %v313, 4294901760
      %v2321 = vsub.f32 %v313, %v2320
      %2322 = vmatprep.subr.mxu0 %v2321
      %v2323 = vand.u32 %v312, 4294901760
      %v2324 = vsub.f32 %v312, %v2323
      %2325 = vmatpush2.msra.mxu0 %v2324
      %v2326 = vand.u32 %v311, 4294901760
      %v2327 = vsub.f32 %v311, %v2326
      %2328 = vmatprep.subr.mxu0 %v2327
      %v2329 = vand.u32 %v310, 4294901760
      %v2330 = vsub.f32 %v310, %v2329
      %2331 = vmatpush2.msra.mxu0 %v2330
      %v2332 = vand.u32 %v309, 4294901760
      %v2333 = vsub.f32 %v309, %v2332
      %2334 = vmatprep.subr.mxu0 %v2333
      %v2335 = vand.u32 %v308, 4294901760
      %v2336 = vsub.f32 %v308, %v2335
      %2337 = vmatpush2.msra.mxu0 %v2336
      %v2338 = vand.u32 %v307, 4294901760
      %v2339 = vsub.f32 %v307, %v2338
      %2340 = vmatprep.subr.mxu0 %v2339
      %v2341 = vand.u32 %v306, 4294901760
      %v2342 = vsub.f32 %v306, %v2341
      %2343 = vmatpush2.msra.mxu0 %v2342
      %v2344 = vand.u32 %v305, 4294901760
      %v2345 = vsub.f32 %v305, %v2344
      %2346 = vmatprep.subr.mxu0 %v2345
      %v2347 = vand.u32 %v304, 4294901760
      %v2348 = vsub.f32 %v304, %v2347
      %2349 = vmatpush2.msra.mxu0 %v2348
      %v2350 = vand.u32 %v303, 4294901760
      %v2351 = vsub.f32 %v303, %v2350
      %2352 = vmatprep.subr.mxu0 %v2351
      %v2353 = vand.u32 %v302, 4294901760
      %v2354 = vsub.f32 %v302, %v2353
      %2355 = vmatpush2.msra.mxu0 %v2354
      %v2356 = vand.u32 %v301, 4294901760
      %v2357 = vsub.f32 %v301, %v2356
      %2358 = vmatprep.subr.mxu0 %v2357
      %v2359 = vand.u32 %v300, 4294901760
      %v2360 = vsub.f32 %v300, %v2359
      %2361 = vmatpush2.msra.mxu0 %v2360
      %v2362 = vand.u32 %v299, 4294901760
      %v2363 = vsub.f32 %v299, %v2362
      %2364 = vmatprep.subr.mxu0 %v2363
      %v2365 = vand.u32 %v298, 4294901760
      %v2366 = vsub.f32 %v298, %v2365
      %2367 = vmatpush2.msra.mxu0 %v2366
      %v2368 = vand.u32 %v297, 4294901760
      %v2369 = vsub.f32 %v297, %v2368
      %2370 = vmatprep.subr.mxu0 %v2369
      %v2371 = vand.u32 %v296, 4294901760
      %v2372 = vsub.f32 %v296, %v2371
      %2373 = vmatpush2.msra.mxu0 %v2372
      %v2374 = vand.u32 %v295, 4294901760
      %v2375 = vsub.f32 %v295, %v2374
      %2376 = vmatprep.subr.mxu0 %v2375
      %v2377 = vand.u32 %v294, 4294901760
      %v2378 = vsub.f32 %v294, %v2377
      %2379 = vmatpush2.msra.mxu0 %v2378
      %v2380 = vand.u32 %v293, 4294901760
      %v2381 = vsub.f32 %v293, %v2380
      %2382 = vmatprep.subr.mxu0 %v2381
      %v2383 = vand.u32 %v292, 4294901760
      %v2384 = vsub.f32 %v292, %v2383
      %2385 = vmatpush2.msra.mxu0 %v2384
      %v2386 = vand.u32 %v291, 4294901760
      %v2387 = vsub.f32 %v291, %v2386
      %2388 = vmatprep.subr.mxu0 %v2387
      %v2389 = vand.u32 %v290, 4294901760
      %v2390 = vsub.f32 %v290, %v2389
      %2391 = vmatpush2.msra.mxu0 %v2390
      %v2392 = vand.u32 %v289, 4294901760
      %v2393 = vsub.f32 %v289, %v2392
      %2394 = vmatprep.subr.mxu0 %v2393
      %v2395 = vand.u32 %v288, 4294901760
      %v2396 = vsub.f32 %v288, %v2395
      %2397 = vmatpush2.msra.mxu0 %v2396
      %v2398 = vand.u32 %v287, 4294901760
      %v2399 = vsub.f32 %v287, %v2398
      %2400 = vmatprep.subr.mxu0 %v2399
      %v2401 = vand.u32 %v286, 4294901760
      %v2402 = vsub.f32 %v286, %v2401
      %2403 = vmatpush2.msra.mxu0 %v2402
      %v2404 = vand.u32 %v285, 4294901760
      %v2405 = vsub.f32 %v285, %v2404
      %2406 = vmatprep.subr.mxu0 %v2405
      %v2407 = vand.u32 %v284, 4294901760
      %v2408 = vsub.f32 %v284, %v2407
      %2409 = vmatpush2.msra.mxu0 %v2408
      %v2410 = vand.u32 %v283, 4294901760
      %v2411 = vsub.f32 %v283, %v2410
      %2412 = vmatprep.subr.mxu0 %v2411
      %v2413 = vand.u32 %v282, 4294901760
      %v2414 = vsub.f32 %v282, %v2413
      %2415 = vmatpush2.msra.mxu0 %v2414
      %v2416 = vand.u32 %v1683, 4294901760
      %v2417 = vsub.f32 %v1683, %v2416
      %2418 = vmatprep.mubr.f32.mxu0 %v2417
      %v2419 = vand.u32 %v1682, 4294901760
      %v2420 = vsub.f32 %v1682, %v2419
      %2421 = vmatmul.mubr.f32.gmra.mxu0 %v2420
      %v2422 = vpop.f32.mrf.mxu0
      %v2423 = vadd.f32 %v2220, %v2422
      %v2424 = vpop.f32.mrf.mxu0
      %v2425 = vadd.f32 %v2222, %v2424
      %2426 = vdwg.mxu0
      %v2427 = vand.u32 %v281, 4294901760
      %2428 = vmatprep.subr.mxu0 %v2427
      %v2429 = vand.u32 %v280, 4294901760
      %2430 = vmatpush1.msra.mxu0 %v2429
      %v2431 = vand.u32 %v279, 4294901760
      %2432 = vmatprep.subr.mxu0 %v2431
      %v2433 = vand.u32 %v278, 4294901760
      %2434 = vmatpush1.msra.mxu0 %v2433
      %v2435 = vand.u32 %v277, 4294901760
      %2436 = vmatprep.subr.mxu0 %v2435
      %v2437 = vand.u32 %v276, 4294901760
      %2438 = vmatpush1.msra.mxu0 %v2437
      %v2439 = vand.u32 %v275, 4294901760
      %2440 = vmatprep.subr.mxu0 %v2439
      %v2441 = vand.u32 %v274, 4294901760
      %2442 = vmatpush1.msra.mxu0 %v2441
      %v2443 = vand.u32 %v273, 4294901760
      %2444 = vmatprep.subr.mxu0 %v2443
      %v2445 = vand.u32 %v272, 4294901760
      %2446 = vmatpush1.msra.mxu0 %v2445
      %v2447 = vand.u32 %v271, 4294901760
      %2448 = vmatprep.subr.mxu0 %v2447
      %v2449 = vand.u32 %v270, 4294901760
      %2450 = vmatpush1.msra.mxu0 %v2449
      %v2451 = vand.u32 %v269, 4294901760
      %2452 = vmatprep.subr.mxu0 %v2451
      %v2453 = vand.u32 %v268, 4294901760
      %2454 = vmatpush1.msra.mxu0 %v2453
      %v2455 = vand.u32 %v267, 4294901760
      %2456 = vmatprep.subr.mxu0 %v2455
      %v2457 = vand.u32 %v266, 4294901760
      %2458 = vmatpush1.msra.mxu0 %v2457
      %v2459 = vand.u32 %v265, 4294901760
      %2460 = vmatprep.subr.mxu0 %v2459
      %v2461 = vand.u32 %v264, 4294901760
      %2462 = vmatpush1.msra.mxu0 %v2461
      %v2463 = vand.u32 %v263, 4294901760
      %2464 = vmatprep.subr.mxu0 %v2463
      %v2465 = vand.u32 %v262, 4294901760
      %2466 = vmatpush1.msra.mxu0 %v2465
      %v2467 = vand.u32 %v261, 4294901760
      %2468 = vmatprep.subr.mxu0 %v2467
      %v2469 = vand.u32 %v260, 4294901760
      %2470 = vmatpush1.msra.mxu0 %v2469
      %v2471 = vand.u32 %v259, 4294901760
      %2472 = vmatprep.subr.mxu0 %v2471
      %v2473 = vand.u32 %v258, 4294901760
      %2474 = vmatpush1.msra.mxu0 %v2473
      %v2475 = vand.u32 %v257, 4294901760
      %2476 = vmatprep.subr.mxu0 %v2475
      %v2477 = vand.u32 %v256, 4294901760
      %2478 = vmatpush1.msra.mxu0 %v2477
      %v2479 = vand.u32 %v255, 4294901760
      %2480 = vmatprep.subr.mxu0 %v2479
      %v2481 = vand.u32 %v254, 4294901760
      %2482 = vmatpush1.msra.mxu0 %v2481
      %v2483 = vand.u32 %v253, 4294901760
      %2484 = vmatprep.subr.mxu0 %v2483
      %v2485 = vand.u32 %v252, 4294901760
      %2486 = vmatpush1.msra.mxu0 %v2485
      %v2487 = vand.u32 %v251, 4294901760
      %2488 = vmatprep.subr.mxu0 %v2487
      %v2489 = vand.u32 %v250, 4294901760
      %2490 = vmatpush1.msra.mxu0 %v2489
      %v2491 = vand.u32 %v313, 4294901760
      %2492 = vmatprep.subr.mxu0 %v2491
      %v2493 = vand.u32 %v312, 4294901760
      %2494 = vmatpush2.msra.mxu0 %v2493
      %v2495 = vand.u32 %v311, 4294901760
      %2496 = vmatprep.subr.mxu0 %v2495
      %v2497 = vand.u32 %v310, 4294901760
      %2498 = vmatpush2.msra.mxu0 %v2497
      %v2499 = vand.u32 %v309, 4294901760
      %2500 = vmatprep.subr.mxu0 %v2499
      %v2501 = vand.u32 %v308, 4294901760
      %2502 = vmatpush2.msra.mxu0 %v2501
      %v2503 = vand.u32 %v307, 4294901760
      %2504 = vmatprep.subr.mxu0 %v2503
      %v2505 = vand.u32 %v306, 4294901760
      %2506 = vmatpush2.msra.mxu0 %v2505
      %v2507 = vand.u32 %v305, 4294901760
      %2508 = vmatprep.subr.mxu0 %v2507
      %v2509 = vand.u32 %v304, 4294901760
      %2510 = vmatpush2.msra.mxu0 %v2509
      %v2511 = vand.u32 %v303, 4294901760
      %2512 = vmatprep.subr.mxu0 %v2511
      %v2513 = vand.u32 %v302, 4294901760
      %2514 = vmatpush2.msra.mxu0 %v2513
      %v2515 = vand.u32 %v301, 4294901760
      %2516 = vmatprep.subr.mxu0 %v2515
      %v2517 = vand.u32 %v300, 4294901760
      %2518 = vmatpush2.msra.mxu0 %v2517
      %v2519 = vand.u32 %v299, 4294901760
      %2520 = vmatprep.subr.mxu0 %v2519
      %v2521 = vand.u32 %v298, 4294901760
      %2522 = vmatpush2.msra.mxu0 %v2521
      %v2523 = vand.u32 %v297, 4294901760
      %2524 = vmatprep.subr.mxu0 %v2523
      %v2525 = vand.u32 %v296, 4294901760
      %2526 = vmatpush2.msra.mxu0 %v2525
      %v2527 = vand.u32 %v295, 4294901760
      %2528 = vmatprep.subr.mxu0 %v2527
      %v2529 = vand.u32 %v294, 4294901760
      %2530 = vmatpush2.msra.mxu0 %v2529
      %v2531 = vand.u32 %v293, 4294901760
      %2532 = vmatprep.subr.mxu0 %v2531
      %v2533 = vand.u32 %v292, 4294901760
      %2534 = vmatpush2.msra.mxu0 %v2533
      %v2535 = vand.u32 %v291, 4294901760
      %2536 = vmatprep.subr.mxu0 %v2535
      %v2537 = vand.u32 %v290, 4294901760
      %2538 = vmatpush2.msra.mxu0 %v2537
      %v2539 = vand.u32 %v289, 4294901760
      %2540 = vmatprep.subr.mxu0 %v2539
      %v2541 = vand.u32 %v288, 4294901760
      %2542 = vmatpush2.msra.mxu0 %v2541
      %v2543 = vand.u32 %v287, 4294901760
      %2544 = vmatprep.subr.mxu0 %v2543
      %v2545 = vand.u32 %v286, 4294901760
      %2546 = vmatpush2.msra.mxu0 %v2545
      %v2547 = vand.u32 %v285, 4294901760
      %2548 = vmatprep.subr.mxu0 %v2547
      %v2549 = vand.u32 %v284, 4294901760
      %2550 = vmatpush2.msra.mxu0 %v2549
      %v2551 = vand.u32 %v283, 4294901760
      %2552 = vmatprep.subr.mxu0 %v2551
      %v2553 = vand.u32 %v282, 4294901760
      %2554 = vmatpush2.msra.mxu0 %v2553
      %v2555 = vand.u32 %v1683, 4294901760
      %v2556 = vsub.f32 %v1683, %v2555
      %v2557 = vand.u32 %v2556, 4294901760
      %2558 = vmatprep.mubr.f32.mxu0 %v2557
      %v2559 = vand.u32 %v1682, 4294901760
      %v2560 = vsub.f32 %v1682, %v2559
      %v2561 = vand.u32 %v2560, 4294901760
      %2562 = vmatmul.mubr.f32.gmra.mxu0 %v2561
      %v2563 = vpop.f32.mrf.mxu0
      %v2564 = vadd.f32 %v2423, %v2563
      %v2565 = vpop.f32.mrf.mxu0
      %v2566 = vadd.f32 %v2425, %v2565
      %2567 = vdwg.mxu0
      %v2568 = vand.u32 %v281, 4294901760
      %v2569 = vsub.f32 %v281, %v2568
      %v2570 = vand.u32 %v2569, 4294901760
      %2571 = vmatprep.subr.mxu0 %v2570
      %v2572 = vand.u32 %v280, 4294901760
      %v2573 = vsub.f32 %v280, %v2572
      %v2574 = vand.u32 %v2573, 4294901760
      %2575 = vmatpush1.msra.mxu0 %v2574
      %v2576 = vand.u32 %v279, 4294901760
      %v2577 = vsub.f32 %v279, %v2576
      %v2578 = vand.u32 %v2577, 4294901760
      %2579 = vmatprep.subr.mxu0 %v2578
      %v2580 = vand.u32 %v278, 4294901760
      %v2581 = vsub.f32 %v278, %v2580
      %v2582 = vand.u32 %v2581, 4294901760
      %2583 = vmatpush1.msra.mxu0 %v2582
      %v2584 = vand.u32 %v277, 4294901760
      %v2585 = vsub.f32 %v277, %v2584
      %v2586 = vand.u32 %v2585, 4294901760
      %2587 = vmatprep.subr.mxu0 %v2586
      %v2588 = vand.u32 %v276, 4294901760
      %v2589 = vsub.f32 %v276, %v2588
      %v2590 = vand.u32 %v2589, 4294901760
      %2591 = vmatpush1.msra.mxu0 %v2590
      %v2592 = vand.u32 %v275, 4294901760
      %v2593 = vsub.f32 %v275, %v2592
      %v2594 = vand.u32 %v2593, 4294901760
      %2595 = vmatprep.subr.mxu0 %v2594
      %v2596 = vand.u32 %v274, 4294901760
      %v2597 = vsub.f32 %v274, %v2596
      %v2598 = vand.u32 %v2597, 4294901760
      %2599 = vmatpush1.msra.mxu0 %v2598
      %v2600 = vand.u32 %v273, 4294901760
      %v2601 = vsub.f32 %v273, %v2600
      %v2602 = vand.u32 %v2601, 4294901760
      %2603 = vmatprep.subr.mxu0 %v2602
      %v2604 = vand.u32 %v272, 4294901760
      %v2605 = vsub.f32 %v272, %v2604
      %v2606 = vand.u32 %v2605, 4294901760
      %2607 = vmatpush1.msra.mxu0 %v2606
      %v2608 = vand.u32 %v271, 4294901760
      %v2609 = vsub.f32 %v271, %v2608
      %v2610 = vand.u32 %v2609, 4294901760
      %2611 = vmatprep.subr.mxu0 %v2610
      %v2612 = vand.u32 %v270, 4294901760
      %v2613 = vsub.f32 %v270, %v2612
      %v2614 = vand.u32 %v2613, 4294901760
      %2615 = vmatpush1.msra.mxu0 %v2614
      %v2616 = vand.u32 %v269, 4294901760
      %v2617 = vsub.f32 %v269, %v2616
      %v2618 = vand.u32 %v2617, 4294901760
      %2619 = vmatprep.subr.mxu0 %v2618
      %v2620 = vand.u32 %v268, 4294901760
      %v2621 = vsub.f32 %v268, %v2620
      %v2622 = vand.u32 %v2621, 4294901760
      %2623 = vmatpush1.msra.mxu0 %v2622
      %v2624 = vand.u32 %v267, 4294901760
      %v2625 = vsub.f32 %v267, %v2624
      %v2626 = vand.u32 %v2625, 4294901760
      %2627 = vmatprep.subr.mxu0 %v2626
      %v2628 = vand.u32 %v266, 4294901760
      %v2629 = vsub.f32 %v266, %v2628
      %v2630 = vand.u32 %v2629, 4294901760
      %2631 = vmatpush1.msra.mxu0 %v2630
      %v2632 = vand.u32 %v265, 4294901760
      %v2633 = vsub.f32 %v265, %v2632
      %v2634 = vand.u32 %v2633, 4294901760
      %2635 = vmatprep.subr.mxu0 %v2634
      %v2636 = vand.u32 %v264, 4294901760
      %v2637 = vsub.f32 %v264, %v2636
      %v2638 = vand.u32 %v2637, 4294901760
      %2639 = vmatpush1.msra.mxu0 %v2638
      %v2640 = vand.u32 %v263, 4294901760
      %v2641 = vsub.f32 %v263, %v2640
      %v2642 = vand.u32 %v2641, 4294901760
      %2643 = vmatprep.subr.mxu0 %v2642
      %v2644 = vand.u32 %v262, 4294901760
      %v2645 = vsub.f32 %v262, %v2644
      %v2646 = vand.u32 %v2645, 4294901760
      %2647 = vmatpush1.msra.mxu0 %v2646
      %v2648 = vand.u32 %v261, 4294901760
      %v2649 = vsub.f32 %v261, %v2648
      %v2650 = vand.u32 %v2649, 4294901760
      %2651 = vmatprep.subr.mxu0 %v2650
      %v2652 = vand.u32 %v260, 4294901760
      %v2653 = vsub.f32 %v260, %v2652
      %v2654 = vand.u32 %v2653, 4294901760
      %2655 = vmatpush1.msra.mxu0 %v2654
      %v2656 = vand.u32 %v259, 4294901760
      %v2657 = vsub.f32 %v259, %v2656
      %v2658 = vand.u32 %v2657, 4294901760
      %2659 = vmatprep.subr.mxu0 %v2658
      %v2660 = vand.u32 %v258, 4294901760
      %v2661 = vsub.f32 %v258, %v2660
      %v2662 = vand.u32 %v2661, 4294901760
      %2663 = vmatpush1.msra.mxu0 %v2662
      %v2664 = vand.u32 %v257, 4294901760
      %v2665 = vsub.f32 %v257, %v2664
      %v2666 = vand.u32 %v2665, 4294901760
      %2667 = vmatprep.subr.mxu0 %v2666
      %v2668 = vand.u32 %v256, 4294901760
      %v2669 = vsub.f32 %v256, %v2668
      %v2670 = vand.u32 %v2669, 4294901760
      %2671 = vmatpush1.msra.mxu0 %v2670
      %v2672 = vand.u32 %v255, 4294901760
      %v2673 = vsub.f32 %v255, %v2672
      %v2674 = vand.u32 %v2673, 4294901760
      %2675 = vmatprep.subr.mxu0 %v2674
      %v2676 = vand.u32 %v254, 4294901760
      %v2677 = vsub.f32 %v254, %v2676
      %v2678 = vand.u32 %v2677, 4294901760
      %2679 = vmatpush1.msra.mxu0 %v2678
      %v2680 = vand.u32 %v253, 4294901760
      %v2681 = vsub.f32 %v253, %v2680
      %v2682 = vand.u32 %v2681, 4294901760
      %2683 = vmatprep.subr.mxu0 %v2682
      %v2684 = vand.u32 %v252, 4294901760
      %v2685 = vsub.f32 %v252, %v2684
      %v2686 = vand.u32 %v2685, 4294901760
      %2687 = vmatpush1.msra.mxu0 %v2686
      %v2688 = vand.u32 %v251, 4294901760
      %v2689 = vsub.f32 %v251, %v2688
      %v2690 = vand.u32 %v2689, 4294901760
      %2691 = vmatprep.subr.mxu0 %v2690
      %v2692 = vand.u32 %v250, 4294901760
      %v2693 = vsub.f32 %v250, %v2692
      %v2694 = vand.u32 %v2693, 4294901760
      %2695 = vmatpush1.msra.mxu0 %v2694
      %v2696 = vand.u32 %v313, 4294901760
      %v2697 = vsub.f32 %v313, %v2696
      %v2698 = vand.u32 %v2697, 4294901760
      %2699 = vmatprep.subr.mxu0 %v2698
      %v2700 = vand.u32 %v312, 4294901760
      %v2701 = vsub.f32 %v312, %v2700
      %v2702 = vand.u32 %v2701, 4294901760
      %2703 = vmatpush2.msra.mxu0 %v2702
      %v2704 = vand.u32 %v311, 4294901760
      %v2705 = vsub.f32 %v311, %v2704
      %v2706 = vand.u32 %v2705, 4294901760
      %2707 = vmatprep.subr.mxu0 %v2706
      %v2708 = vand.u32 %v310, 4294901760
      %v2709 = vsub.f32 %v310, %v2708
      %v2710 = vand.u32 %v2709, 4294901760
      %2711 = vmatpush2.msra.mxu0 %v2710
      %v2712 = vand.u32 %v309, 4294901760
      %v2713 = vsub.f32 %v309, %v2712
      %v2714 = vand.u32 %v2713, 4294901760
      %2715 = vmatprep.subr.mxu0 %v2714
      %v2716 = vand.u32 %v308, 4294901760
      %v2717 = vsub.f32 %v308, %v2716
      %v2718 = vand.u32 %v2717, 4294901760
      %2719 = vmatpush2.msra.mxu0 %v2718
      %v2720 = vand.u32 %v307, 4294901760
      %v2721 = vsub.f32 %v307, %v2720
      %v2722 = vand.u32 %v2721, 4294901760
      %2723 = vmatprep.subr.mxu0 %v2722
      %v2724 = vand.u32 %v306, 4294901760
      %v2725 = vsub.f32 %v306, %v2724
      %v2726 = vand.u32 %v2725, 4294901760
      %2727 = vmatpush2.msra.mxu0 %v2726
      %v2728 = vand.u32 %v305, 4294901760
      %v2729 = vsub.f32 %v305, %v2728
      %v2730 = vand.u32 %v2729, 4294901760
      %2731 = vmatprep.subr.mxu0 %v2730
      %v2732 = vand.u32 %v304, 4294901760
      %v2733 = vsub.f32 %v304, %v2732
      %v2734 = vand.u32 %v2733, 4294901760
      %2735 = vmatpush2.msra.mxu0 %v2734
      %v2736 = vand.u32 %v303, 4294901760
      %v2737 = vsub.f32 %v303, %v2736
      %v2738 = vand.u32 %v2737, 4294901760
      %2739 = vmatprep.subr.mxu0 %v2738
      %v2740 = vand.u32 %v302, 4294901760
      %v2741 = vsub.f32 %v302, %v2740
      %v2742 = vand.u32 %v2741, 4294901760
      %2743 = vmatpush2.msra.mxu0 %v2742
      %v2744 = vand.u32 %v301, 4294901760
      %v2745 = vsub.f32 %v301, %v2744
      %v2746 = vand.u32 %v2745, 4294901760
      %2747 = vmatprep.subr.mxu0 %v2746
      %v2748 = vand.u32 %v300, 4294901760
      %v2749 = vsub.f32 %v300, %v2748
      %v2750 = vand.u32 %v2749, 4294901760
      %2751 = vmatpush2.msra.mxu0 %v2750
      %v2752 = vand.u32 %v299, 4294901760
      %v2753 = vsub.f32 %v299, %v2752
      %v2754 = vand.u32 %v2753, 4294901760
      %2755 = vmatprep.subr.mxu0 %v2754
      %v2756 = vand.u32 %v298, 4294901760
      %v2757 = vsub.f32 %v298, %v2756
      %v2758 = vand.u32 %v2757, 4294901760
      %2759 = vmatpush2.msra.mxu0 %v2758
      %v2760 = vand.u32 %v297, 4294901760
      %v2761 = vsub.f32 %v297, %v2760
      %v2762 = vand.u32 %v2761, 4294901760
      %2763 = vmatprep.subr.mxu0 %v2762
      %v2764 = vand.u32 %v296, 4294901760
      %v2765 = vsub.f32 %v296, %v2764
      %v2766 = vand.u32 %v2765, 4294901760
      %2767 = vmatpush2.msra.mxu0 %v2766
      %v2768 = vand.u32 %v295, 4294901760
      %v2769 = vsub.f32 %v295, %v2768
      %v2770 = vand.u32 %v2769, 4294901760
      %2771 = vmatprep.subr.mxu0 %v2770
      %v2772 = vand.u32 %v294, 4294901760
      %v2773 = vsub.f32 %v294, %v2772
      %v2774 = vand.u32 %v2773, 4294901760
      %2775 = vmatpush2.msra.mxu0 %v2774
      %v2776 = vand.u32 %v293, 4294901760
      %v2777 = vsub.f32 %v293, %v2776
      %v2778 = vand.u32 %v2777, 4294901760
      %2779 = vmatprep.subr.mxu0 %v2778
      %v2780 = vand.u32 %v292, 4294901760
      %v2781 = vsub.f32 %v292, %v2780
      %v2782 = vand.u32 %v2781, 4294901760
      %2783 = vmatpush2.msra.mxu0 %v2782
      %v2784 = vand.u32 %v291, 4294901760
      %v2785 = vsub.f32 %v291, %v2784
      %v2786 = vand.u32 %v2785, 4294901760
      %2787 = vmatprep.subr.mxu0 %v2786
      %v2788 = vand.u32 %v290, 4294901760
      %v2789 = vsub.f32 %v290, %v2788
      %v2790 = vand.u32 %v2789, 4294901760
      %2791 = vmatpush2.msra.mxu0 %v2790
      %v2792 = vand.u32 %v289, 4294901760
      %v2793 = vsub.f32 %v289, %v2792
      %v2794 = vand.u32 %v2793, 4294901760
      %2795 = vmatprep.subr.mxu0 %v2794
      %v2796 = vand.u32 %v288, 4294901760
      %v2797 = vsub.f32 %v288, %v2796
      %v2798 = vand.u32 %v2797, 4294901760
      %2799 = vmatpush2.msra.mxu0 %v2798
      %v2800 = vand.u32 %v287, 4294901760
      %v2801 = vsub.f32 %v287, %v2800
      %v2802 = vand.u32 %v2801, 4294901760
      %2803 = vmatprep.subr.mxu0 %v2802
      %v2804 = vand.u32 %v286, 4294901760
      %v2805 = vsub.f32 %v286, %v2804
      %v2806 = vand.u32 %v2805, 4294901760
      %2807 = vmatpush2.msra.mxu0 %v2806
      %v2808 = vand.u32 %v285, 4294901760
      %v2809 = vsub.f32 %v285, %v2808
      %v2810 = vand.u32 %v2809, 4294901760
      %2811 = vmatprep.subr.mxu0 %v2810
      %v2812 = vand.u32 %v284, 4294901760
      %v2813 = vsub.f32 %v284, %v2812
      %v2814 = vand.u32 %v2813, 4294901760
      %2815 = vmatpush2.msra.mxu0 %v2814
      %v2816 = vand.u32 %v283, 4294901760
      %v2817 = vsub.f32 %v283, %v2816
      %v2818 = vand.u32 %v2817, 4294901760
      %2819 = vmatprep.subr.mxu0 %v2818
      %v2820 = vand.u32 %v282, 4294901760
      %v2821 = vsub.f32 %v282, %v2820
      %v2822 = vand.u32 %v2821, 4294901760
      %2823 = vmatpush2.msra.mxu0 %v2822
      %v2824 = vand.u32 %v1683, 4294901760
      %2825 = vmatprep.mubr.f32.mxu0 %v2824
      %v2826 = vand.u32 %v1682, 4294901760
      %2827 = vmatmul.mubr.f32.gmra.mxu0 %v2826
      %v2828 = vpop.f32.mrf.mxu0
      %v2829 = vadd.f32 %v2564, %v2828
      %v2830 = vpop.f32.mrf.mxu0
      %v2831 = vadd.f32 %v2566, %v2830
      %2832 = vdwg.mxu0
      %v2833 = vand.u32 %v281, 4294901760
      %2834 = vmatprep.subr.mxu0 %v2833
      %v2835 = vand.u32 %v280, 4294901760
      %2836 = vmatpush1.msra.mxu0 %v2835
      %v2837 = vand.u32 %v279, 4294901760
      %2838 = vmatprep.subr.mxu0 %v2837
      %v2839 = vand.u32 %v278, 4294901760
      %2840 = vmatpush1.msra.mxu0 %v2839
      %v2841 = vand.u32 %v277, 4294901760
      %2842 = vmatprep.subr.mxu0 %v2841
      %v2843 = vand.u32 %v276, 4294901760
      %2844 = vmatpush1.msra.mxu0 %v2843
      %v2845 = vand.u32 %v275, 4294901760
      %2846 = vmatprep.subr.mxu0 %v2845
      %v2847 = vand.u32 %v274, 4294901760
      %2848 = vmatpush1.msra.mxu0 %v2847
      %v2849 = vand.u32 %v273, 4294901760
      %2850 = vmatprep.subr.mxu0 %v2849
      %v2851 = vand.u32 %v272, 4294901760
      %2852 = vmatpush1.msra.mxu0 %v2851
      %v2853 = vand.u32 %v271, 4294901760
      %2854 = vmatprep.subr.mxu0 %v2853
      %v2855 = vand.u32 %v270, 4294901760
      %2856 = vmatpush1.msra.mxu0 %v2855
      %v2857 = vand.u32 %v269, 4294901760
      %2858 = vmatprep.subr.mxu0 %v2857
      %v2859 = vand.u32 %v268, 4294901760
      %2860 = vmatpush1.msra.mxu0 %v2859
      %v2861 = vand.u32 %v267, 4294901760
      %2862 = vmatprep.subr.mxu0 %v2861
      %v2863 = vand.u32 %v266, 4294901760
      %2864 = vmatpush1.msra.mxu0 %v2863
      %v2865 = vand.u32 %v265, 4294901760
      %2866 = vmatprep.subr.mxu0 %v2865
      %v2867 = vand.u32 %v264, 4294901760
      %2868 = vmatpush1.msra.mxu0 %v2867
      %v2869 = vand.u32 %v263, 4294901760
      %2870 = vmatprep.subr.mxu0 %v2869
      %v2871 = vand.u32 %v262, 4294901760
      %2872 = vmatpush1.msra.mxu0 %v2871
      %v2873 = vand.u32 %v261, 4294901760
      %2874 = vmatprep.subr.mxu0 %v2873
      %v2875 = vand.u32 %v260, 4294901760
      %2876 = vmatpush1.msra.mxu0 %v2875
      %v2877 = vand.u32 %v259, 4294901760
      %2878 = vmatprep.subr.mxu0 %v2877
      %v2879 = vand.u32 %v258, 4294901760
      %2880 = vmatpush1.msra.mxu0 %v2879
      %v2881 = vand.u32 %v257, 4294901760
      %2882 = vmatprep.subr.mxu0 %v2881
      %v2883 = vand.u32 %v256, 4294901760
      %2884 = vmatpush1.msra.mxu0 %v2883
      %v2885 = vand.u32 %v255, 4294901760
      %2886 = vmatprep.subr.mxu0 %v2885
      %v2887 = vand.u32 %v254, 4294901760
      %2888 = vmatpush1.msra.mxu0 %v2887
      %v2889 = vand.u32 %v253, 4294901760
      %2890 = vmatprep.subr.mxu0 %v2889
      %v2891 = vand.u32 %v252, 4294901760
      %2892 = vmatpush1.msra.mxu0 %v2891
      %v2893 = vand.u32 %v251, 4294901760
      %2894 = vmatprep.subr.mxu0 %v2893
      %v2895 = vand.u32 %v250, 4294901760
      %2896 = vmatpush1.msra.mxu0 %v2895
      %v2897 = vand.u32 %v313, 4294901760
      %2898 = vmatprep.subr.mxu0 %v2897
      %v2899 = vand.u32 %v312, 4294901760
      %2900 = vmatpush2.msra.mxu0 %v2899
      %v2901 = vand.u32 %v311, 4294901760
      %2902 = vmatprep.subr.mxu0 %v2901
      %v2903 = vand.u32 %v310, 4294901760
      %2904 = vmatpush2.msra.mxu0 %v2903
      %v2905 = vand.u32 %v309, 4294901760
      %2906 = vmatprep.subr.mxu0 %v2905
      %v2907 = vand.u32 %v308, 4294901760
      %2908 = vmatpush2.msra.mxu0 %v2907
      %v2909 = vand.u32 %v307, 4294901760
      %2910 = vmatprep.subr.mxu0 %v2909
      %v2911 = vand.u32 %v306, 4294901760
      %2912 = vmatpush2.msra.mxu0 %v2911
      %v2913 = vand.u32 %v305, 4294901760
      %2914 = vmatprep.subr.mxu0 %v2913
      %v2915 = vand.u32 %v304, 4294901760
      %2916 = vmatpush2.msra.mxu0 %v2915
      %v2917 = vand.u32 %v303, 4294901760
      %2918 = vmatprep.subr.mxu0 %v2917
      %v2919 = vand.u32 %v302, 4294901760
      %2920 = vmatpush2.msra.mxu0 %v2919
      %v2921 = vand.u32 %v301, 4294901760
      %2922 = vmatprep.subr.mxu0 %v2921
      %v2923 = vand.u32 %v300, 4294901760
      %2924 = vmatpush2.msra.mxu0 %v2923
      %v2925 = vand.u32 %v299, 4294901760
      %2926 = vmatprep.subr.mxu0 %v2925
      %v2927 = vand.u32 %v298, 4294901760
      %2928 = vmatpush2.msra.mxu0 %v2927
      %v2929 = vand.u32 %v297, 4294901760
      %2930 = vmatprep.subr.mxu0 %v2929
      %v2931 = vand.u32 %v296, 4294901760
      %2932 = vmatpush2.msra.mxu0 %v2931
      %v2933 = vand.u32 %v295, 4294901760
      %2934 = vmatprep.subr.mxu0 %v2933
      %v2935 = vand.u32 %v294, 4294901760
      %2936 = vmatpush2.msra.mxu0 %v2935
      %v2937 = vand.u32 %v293, 4294901760
      %2938 = vmatprep.subr.mxu0 %v2937
      %v2939 = vand.u32 %v292, 4294901760
      %2940 = vmatpush2.msra.mxu0 %v2939
      %v2941 = vand.u32 %v291, 4294901760
      %2942 = vmatprep.subr.mxu0 %v2941
      %v2943 = vand.u32 %v290, 4294901760
      %2944 = vmatpush2.msra.mxu0 %v2943
      %v2945 = vand.u32 %v289, 4294901760
      %2946 = vmatprep.subr.mxu0 %v2945
      %v2947 = vand.u32 %v288, 4294901760
      %2948 = vmatpush2.msra.mxu0 %v2947
      %v2949 = vand.u32 %v287, 4294901760
      %2950 = vmatprep.subr.mxu0 %v2949
      %v2951 = vand.u32 %v286, 4294901760
      %2952 = vmatpush2.msra.mxu0 %v2951
      %v2953 = vand.u32 %v285, 4294901760
      %2954 = vmatprep.subr.mxu0 %v2953
      %v2955 = vand.u32 %v284, 4294901760
      %2956 = vmatpush2.msra.mxu0 %v2955
      %v2957 = vand.u32 %v283, 4294901760
      %2958 = vmatprep.subr.mxu0 %v2957
      %v2959 = vand.u32 %v282, 4294901760
      %2960 = vmatpush2.msra.mxu0 %v2959
      %v2961 = vand.u32 %v1683, 4294901760
      %2962 = vmatprep.mubr.f32.mxu0 %v2961
      %v2963 = vand.u32 %v1682, 4294901760
      %2964 = vmatmul.mubr.f32.gmra.mxu0 %v2963
      %v2965 = vpop.f32.mrf.mxu0
      %v2966 = vadd.f32 %v2829, %v2965
      %v2967 = vpop.f32.mrf.mxu0
      %v2968 = vadd.f32 %v2831, %v2967
      %2969 = vdwg.mxu0
      %v2970 = vxor.u32 %v2966, 2147483648
      %v2971 = vxor.u32 %v2968, 2147483648
      %v2972 = vmul.f32 %v2970, 1.442695
      %v2973 = vpow.pop %v2972
      %v2974 = vmul.f32 %v2971, 1.442695
      %v2975 = vpow.pop %v2974
      %v2976 = vadd.f32 %v2973, 1.0
      %v2977 = vadd.f32 %v2975, 1.0
      %v2978 = vrcp.pop %v2976
      %v2979 = vmul.f32 1.0, %v2978
      %v2980 = vrcp.pop %v2977
      %v2981 = vmul.f32 1.0, %v2980
      %v2984 = vcombine.low %v2979, %v2981
      %v2986 = vunpack.c.l.s4 1983009808
      %v2987 = vunpack.c.0.s8 %v2986
      %v2988 = vlaneseq
      %v2989 = vshrl.u32 %v2988, 7
      %v2990 = vsub.s32 %v2987, %v2989
      %v2991 = vrot.slane %v2984, %v2990
      %2993 = vst [vmem:[#allocation9] sm:$0xf] %v2991
    $region29: #{tpu_custom_call.1} parent=1 // pred_fallthru
      _
    // Predicated region
    $region30: #{tpu_custom_call.1} parent=1 // pred_check
      _
    $region31: #{tpu_custom_call.1} parent=1 // pred_check_branch
      %2995 = sbr.rel (0) target = $region33
    $region32: #{tpu_custom_call.1} parent=1 // pred_region
      %s2997 = ssub.s32 64, 64
      %2998 = vsyncadd [#allocation6], %s2997
      %s3000 = sshll.u32 [#allocation9], 4
      %s3001 = int_to_ptr.vmem [resolvable:$true] %s3000
      %3003 = dma.vmem_to_hbm [thread:$0]  %s3001, 64, %s2, [#allocation6]
    $region33: #{tpu_custom_call.1} parent=1 // pred_fallthru
      _
    // Predicated region
    $region34: #{tpu_custom_call.1} parent=1 // pred_check
      _
    $region35: #{tpu_custom_call.1} parent=1 // pred_check_branch
      %3005 = sbr.rel (0) target = $region37
    $region36: #{tpu_custom_call.1} parent=1 // pred_region
      %3006 = dma.done [#allocation6], 64
    $region37: #{tpu_custom_call.1} parent=1 // pred_fallthru
      _
    %3007 = vsyncpa [#allocation5], 1
    %3008 = vsyncpa [#allocation8], 1
    %3009 = vsyncpa [#allocation6], 1

</llo_original>
